<compile_context>
chip_gen: v6e
topology: v6e:2x2x1
jax: 0.10.0
libtpu: 0.0.40
codegen_flags: <defaults>
</compile_context>

<pallas_src>
import jax
import jax.numpy as jnp
from jax import lax
from jax.experimental import pallas as pl
from jax.experimental.pallas import tpu as pltpu

MATMUL_DTYPE = jnp.bfloat16      # MXU operand dtype (accumulation is f32)
ROW_TILE = 256                   # row tile for the dense / projection kernels


# ----------------------------------------------------------------------------
# Pallas kernels
# ----------------------------------------------------------------------------
def dense_bias_kernel(x_ref, w_ref, b_ref, o_ref):
    """o = x @ w^T + b  (PyTorch nn.Linear layout, no transpose materialized).

    x_ref: (TN, K)   w_ref: (G, K)   b_ref: (1, G)   o_ref: (TN, G) f32
    """
    acc = lax.dot_general(x_ref[...], w_ref[...],
                          dimension_numbers=(((1,), (1,)), ((), ())),
                          preferred_element_type=jnp.float32)
    o_ref[...] = acc + b_ref[...]


def dense_logsoftmax_kernel(x_ref, w_ref, b_ref, o_ref):
    """o = log_softmax(x @ w^T + b)  over the last dim (f32 math)."""
    logits = lax.dot_general(x_ref[...], w_ref[...],
                             dimension_numbers=(((1,), (1,)), ((), ())),
                             preferred_element_type=jnp.float32) + b_ref[...]
    m = jnp.max(logits, axis=-1, keepdims=True)
    z = logits - m
    lse = jnp.log(jnp.sum(jnp.exp(z), axis=-1, keepdims=True))
    o_ref[...] = z - lse


def lstm_recurrence_kernel(xp_ref, whh_ref, h0_ref, c0_ref,
                           out_ref, hT_ref, cT_ref, h_scr, c_scr):
    """One LSTM timestep per grid iteration (grid=(S,), "arbitrary").

    xp_ref:  (B, 4H) precomputed x_t @ W_ih^T + b_ih + b_hh  (f32)
    whh_ref: (4H, H) hidden-hidden weights, PyTorch layout (gate order i,f,g,o)
    h0_ref:  (B, H)  initial hidden state (f32)
    c0_ref:  (B, H)  initial cell state   (f32)
    out_ref: (B, H)  per-step hidden state (this timestep's output block)
    hT_ref:  (B, H)  final hidden state (written on the last step only)
    cT_ref:  (B, H)  final cell state   (written on the last step only)
    h_scr/c_scr: VMEM (B, H) f32 carry, persistent across grid steps.
    """
    t = pl.program_id(0)
    H = h0_ref.shape[1]

    @pl.when(t == 0)
    def _():
        h_scr[...] = h0_ref[...]
        c_scr[...] = c0_ref[...]

    h = h_scr[...]
    c = c_scr[...]

    # h @ W_hh^T : contract on axis 1 of both operands -> no transpose.
    hh = lax.dot_general(h.astype(whh_ref.dtype), whh_ref[...],
                         dimension_numbers=(((1,), (1,)), ((), ())),
                         preferred_element_type=jnp.float32)
    gates = xp_ref[...] + hh                       # bias already folded into xp

    # NOTE: for production, pick H as a multiple of 128 so these slices are
    # lane-aligned.
    i_g = jax.nn.sigmoid(gates[:, 0 * H:1 * H])
    f_g = jax.nn.sigmoid(gates[:, 1 * H:2 * H])
    g_g = jnp.tanh(gates[:, 2 * H:3 * H])
    o_g = jax.nn.sigmoid(gates[:, 3 * H:4 * H])

    c_new = f_g * c + i_g * g_g
    h_new = o_g * jnp.tanh(c_new)

    h_scr[...] = h_new
    c_scr[...] = c_new
    out_ref[...] = h_new.astype(out_ref.dtype)

    @pl.when(t == pl.num_programs(0) - 1)
    def _():
        hT_ref[...] = h_new
        cT_ref[...] = c_new


# ----------------------------------------------------------------------------
# Pallas wrappers
# ----------------------------------------------------------------------------
def _dense_rows(kernel_fn, x, w, b, out_cols, max_tile=ROW_TILE):
    """Row-tiled  x (N,K) -> (N,out_cols)  dense call; row axis is parallel."""
    n, k = x.shape
    if n <= max_tile:
        tile, n_pad = n, n
    else:
        tile = max_tile
        n_pad = ((n + tile - 1) // tile) * tile
    if n_pad != n:
        x = jnp.pad(x, ((0, n_pad - n), (0, 0)))   # padded rows dropped below

    out = pl.pallas_call(
        kernel_fn,
        out_shape=jax.ShapeDtypeStruct((n_pad, out_cols), jnp.float32),
        grid_spec=pltpu.PrefetchScalarGridSpec(
            num_scalar_prefetch=0,
            grid=(n_pad // tile,),
            in_specs=[pl.BlockSpec((tile, k), lambda i: (i, 0)),
                      pl.BlockSpec(w.shape, lambda i: (0, 0)),
                      pl.BlockSpec((1, out_cols), lambda i: (0, 0))],
            out_specs=pl.BlockSpec((tile, out_cols), lambda i: (i, 0))),
        compiler_params=pltpu.CompilerParams(
            dimension_semantics=("parallel",)),
    )(x, w, b.reshape(1, out_cols))
    return out[:n] if n_pad != n else out


def lstm_forward(x_tm, w_ih, w_hh, b_ih, b_hh, h0, c0,
                 matmul_dtype=MATMUL_DTYPE):
    """Single-layer LSTM, time-major input x_tm (S, B, H).

    Returns (seq_out (S,B,H) in matmul_dtype, hT (B,H) f32, cT (B,H) f32).
    """
    S, B, H = x_tm.shape

    # Hoisted input projection for ALL timesteps: one big (S*B, H)x(H, 4H)
    # matmul; the summed biases are folded in here (out of the recurrence).
    bias = (b_ih + b_hh).astype(jnp.float32)
    xp = _dense_rows(dense_bias_kernel,
                     x_tm.reshape(S * B, H).astype(matmul_dtype),
                     w_ih.astype(matmul_dtype),
                     bias, 4 * H)
    xp = xp.reshape(S, B, 4 * H)

    seq_out, hT, cT = pl.pallas_call(
        lstm_recurrence_kernel,
        out_shape=(jax.ShapeDtypeStruct((S, B, H), matmul_dtype),
                   jax.ShapeDtypeStruct((B, H), jnp.float32),
                   jax.ShapeDtypeStruct((B, H), jnp.float32)),
        grid_spec=pltpu.PrefetchScalarGridSpec(
            num_scalar_prefetch=0,
            grid=(S,),
            in_specs=[pl.BlockSpec((None, B, 4 * H), lambda t: (t, 0, 0)),
                      pl.BlockSpec((4 * H, H), lambda t: (0, 0)),
                      pl.BlockSpec((B, H), lambda t: (0, 0)),
                      pl.BlockSpec((B, H), lambda t: (0, 0))],
            out_specs=(pl.BlockSpec((None, B, H), lambda t: (t, 0, 0)),
                       pl.BlockSpec((B, H), lambda t: (0, 0)),
                       pl.BlockSpec((B, H), lambda t: (0, 0))),
            scratch_shapes=[pltpu.VMEM((B, H), jnp.float32),
                            pltpu.VMEM((B, H), jnp.float32)]),
        compiler_params=pltpu.CompilerParams(
            dimension_semantics=("arbitrary",)),
    )(xp, w_hh.astype(matmul_dtype), h0, c0)
    return seq_out, hT, cT


def project_log_softmax(h_rows, w_out, b_out, matmul_dtype=MATMUL_DTYPE):
    """h_rows: (N, H) -> log-probs (N, V), row-tiled, parallel grid axis."""
    V = w_out.shape[0]
    return _dense_rows(dense_logsoftmax_kernel,
                       h_rows.astype(matmul_dtype),
                       w_out.astype(matmul_dtype),
                       b_out.astype(jnp.float32), V)


# ----------------------------------------------------------------------------
# Model: parameters + forward
# ----------------------------------------------------------------------------
def init_params(key, vocab_size, hidden_size):
    H, V = hidden_size, vocab_size
    ks = jax.random.split(key, 12)
    s = 0.1
    return {
        # EncoderRNN
        "enc_emb":  jax.random.normal(ks[0], (V, H), jnp.float32) * s,
        "enc_w_ih": jax.random.normal(ks[1], (4 * H, H), jnp.float32) * s,
        "enc_w_hh": jax.random.normal(ks[2], (4 * H, H), jnp.float32) * s,
        "enc_b_ih": jax.random.normal(ks[3], (4 * H,), jnp.float32) * s,
        "enc_b_hh": jax.random.normal(ks[4], (4 * H,), jnp.float32) * s,
        # DecoderRNN
        "dec_emb":  jax.random.normal(ks[5], (V, H), jnp.float32) * s,
        "dec_w_ih": jax.random.normal(ks[6], (4 * H, H), jnp.float32) * s,
        "dec_w_hh": jax.random.normal(ks[7], (4 * H, H), jnp.float32) * s,
        "dec_b_ih": jax.random.normal(ks[8], (4 * H,), jnp.float32) * s,
        "dec_b_hh": jax.random.normal(ks[9], (4 * H,), jnp.float32) * s,
        "out_w":    jax.random.normal(ks[10], (V, H), jnp.float32) * s,
        "out_b":    jax.random.normal(ks[11], (V,), jnp.float32) * s,
    }


def autoencoder_forward(params, input_tensor, target_tensor, sos_token_id=0,
                        matmul_dtype=MATMUL_DTYPE):
    """Mirrors Autoencoder.forward (eval mode: dropout = identity).

    input_tensor:  (B, S) int32 token ids
    target_tensor: (B, T) int32 token ids
    Returns: log_probs (B, T, V), (h (1,B,H), c (1,B,H))
    """
    B, S = input_tensor.shape
    H = params["enc_emb"].shape[1]
    V = params["out_w"].shape[0]

    # ---- EncoderRNN ----
    # Gather directly into time-major layout (transpose the cheap int ids,
    # never the (B,S,H) activations).
    enc_x = params["enc_emb"][input_tensor.T].astype(matmul_dtype)    # (S,B,H)
    h0 = jnp.zeros((B, H), jnp.float32)
    c0 = jnp.zeros((B, H), jnp.float32)
    _enc_out, enc_h, enc_c = lstm_forward(
        enc_x, params["enc_w_ih"], params["enc_w_hh"],
        params["enc_b_ih"], params["enc_b_hh"], h0, c0, matmul_dtype)

    # ---- DecoderRNN (teacher forcing with SOS shift) ----
    dec_ids = jnp.full_like(target_tensor, sos_token_id)
    dec_ids = dec_ids.at[:, 1:].set(target_tensor[:, :-1])
    dec_x = params["dec_emb"][dec_ids.T].astype(matmul_dtype)         # (T,B,H)
    T = dec_x.shape[0]

    dec_out_tm, dec_h, dec_c = lstm_forward(
        dec_x, params["dec_w_ih"], params["dec_w_hh"],
        params["dec_b_ih"], params["dec_b_hh"], enc_h, enc_c, matmul_dtype)

    # Single small (T,B,H) -> (B,T,H) relayout; the V-wide output is produced
    # directly in batch-first row order by the projection kernel.
    dec_rows = jnp.transpose(dec_out_tm, (1, 0, 2)).reshape(B * T, H)
    log_probs = project_log_softmax(dec_rows, params["out_w"],
                                    params["out_b"], matmul_dtype)
    log_probs = log_probs.reshape(B, T, V)

    decoder_hidden = (dec_h[None, ...], dec_c[None, ...])             # (1,B,H)
    return log_probs, decoder_hidden


# ----------------------------------------------------------------------------
# Pure-JAX f32 reference (for correctness check only)
# ----------------------------------------------------------------------------
def _lstm_ref(x_tm, w_ih, w_hh, b_ih, b_hh, h0, c0):
    H = h0.shape[1]

    def step(carry, x_t):
        h, c = carry
        g = x_t @ w_ih.T + h @ w_hh.T + b_ih + b_hh
        i = jax.nn.sigmoid(g[:, 0 * H:1 * H])
        f = jax.nn.sigmoid(g[:, 1 * H:2 * H])
        gg = jnp.tanh(g[:, 2 * H:3 * H])
        o = jax.nn.sigmoid(g[:, 3 * H:4 * H])
        c = f * c + i * gg
        h = o * jnp.tanh(c)
        return (h, c), h

    (hT, cT), out = lax.scan(step, (h0, c0), x_tm)
    return out, hT, cT


def autoencoder_ref(params, input_tensor, target_tensor, sos_token_id=0):
    B, S = input_tensor.shape
    H = params["enc_emb"].shape[1]
    enc_x = params["enc_emb"][input_tensor.T]
    h0 = jnp.zeros((B, H), jnp.float32)
    c0 = jnp.zeros((B, H), jnp.float32)
    _, enc_h, enc_c = _lstm_ref(enc_x, params["enc_w_ih"], params["enc_w_hh"],
                                params["enc_b_ih"], params["enc_b_hh"], h0, c0)
    dec_ids = jnp.full_like(target_tensor, sos_token_id)
    dec_ids = dec_ids.at[:, 1:].set(target_tensor[:, :-1])
    dec_x = params["dec_emb"][dec_ids.T]
    dec_out_tm, dec_h, dec_c = _lstm_ref(
        dec_x, params["dec_w_ih"], params["dec_w_hh"],
        params["dec_b_ih"], params["dec_b_hh"], enc_h, enc_c)
    dec_out = jnp.transpose(dec_out_tm, (1, 0, 2))
    logits = dec_out @ params["out_w"].T + params["out_b"]
    logp = jax.nn.log_softmax(logits, axis=-1)
    return logp, (dec_h[None, ...], dec_c[None, ...])


if __name__ == "__main__":
    B, S, H, V = 2, 8, 32, 16
    SOS = 0

    key = jax.random.PRNGKey(0)
    k_params, k_in, k_tgt = jax.random.split(key, 3)

    params = init_params(k_params, V, H)
    input_tensor = jax.random.randint(k_in, (B, S), 0, V, dtype=jnp.int32)
    target_tensor = jax.random.randint(k_tgt, (B, S), 0, V, dtype=jnp.int32)

    fwd = jax.jit(lambda p, x, y: autoencoder_forward(p, x, y, sos_token_id=SOS))
    log_probs, (h_n, c_n) = fwd(params, input_tensor, target_tensor)
    jax.block_until_ready((log_probs, h_n, c_n))

    # Shape / sanity checks.
    assert log_probs.shape == (B, S, V)
    assert h_n.shape == (1, B, H) and c_n.shape == (1, B, H)
    assert bool(jnp.allclose(jnp.sum(jnp.exp(log_probs), axis=-1), 1.0, atol=1e-4))

    # Pure-JAX f32 reference (kernel uses bf16 matmul operands -> loose tol).
    ref_logp, (ref_h, ref_c) = autoencoder_ref(params, input_tensor,
                                               target_tensor, SOS)
    assert bool(jnp.allclose(log_probs, ref_logp, atol=3e-2))
    assert bool(jnp.allclose(h_n, ref_h, atol=1e-2))
    assert bool(jnp.allclose(c_n, ref_c, atol=1e-2))

    print("KERNEL_OK")
</pallas_src>

<mosaic_0001>
module attributes {stable_mosaic.version = 11 : i64} {
  func.func @lstm_recurrence_kernel(%arg0: i32, %arg1: memref<1x2x128xf32, #tpu.memory_space<vmem>>, %arg2: memref<128x32xbf16, #tpu.memory_space<vmem>>, %arg3: memref<2x32xf32, #tpu.memory_space<vmem>>, %arg4: memref<2x32xf32, #tpu.memory_space<vmem>>, %arg5: memref<1x2x32xbf16, #tpu.memory_space<vmem>>, %arg6: memref<2x32xf32, #tpu.memory_space<vmem>>, %arg7: memref<2x32xf32, #tpu.memory_space<vmem>>, %arg8: memref<2x32xf32, #tpu.memory_space<vmem>>, %arg9: memref<2x32xf32, #tpu.memory_space<vmem>>) attributes {dimension_semantics = [#tpu.dimension_semantics<arbitrary>], iteration_bounds = array<i64: 8>, scalar_prefetch = 0 : i64, scratch_operands = 2 : i64, tpu.core_type = #tpu.core_type<tc>, window_params = [{transform_indices = @transform_0, window_bounds = array<i64: 1, 2, 128>}, {pipeline_mode = #tpu.pipeline_mode<synchronous>, transform_indices = @transform_1, window_bounds = array<i64: 128, 32>}, {pipeline_mode = #tpu.pipeline_mode<synchronous>, transform_indices = @transform_2, window_bounds = array<i64: 2, 32>}, {pipeline_mode = #tpu.pipeline_mode<synchronous>, transform_indices = @transform_3, window_bounds = array<i64: 2, 32>}, {transform_indices = @transform_4, window_bounds = array<i64: 1, 2, 32>}, {pipeline_mode = #tpu.pipeline_mode<synchronous>, transform_indices = @transform_5, window_bounds = array<i64: 2, 32>}, {pipeline_mode = #tpu.pipeline_mode<synchronous>, transform_indices = @transform_6, window_bounds = array<i64: 2, 32>}]} {
    %c0_i32 = arith.constant 0 : i32
    %0 = arith.cmpi eq, %arg0, %c0_i32 : i32
    %1 = arith.extui %0 : i1 to i32
    %c0_i32_0 = arith.constant 0 : i32
    %2 = arith.cmpi ne, %1, %c0_i32_0 : i32
    scf.if %2 {
      %c0_20 = arith.constant 0 : index
      %c0_21 = arith.constant 0 : index
      %45 = vector.load %arg3[%c0_20, %c0_21] : memref<2x32xf32, #tpu.memory_space<vmem>>, vector<2x32xf32>
      %c0_22 = arith.constant 0 : index
      %c0_23 = arith.constant 0 : index
      %46 = vector.load %arg8[%c0_22, %c0_23] : memref<2x32xf32, #tpu.memory_space<vmem>>, vector<2x32xf32>
      tpu.vector_store %arg8[%c0_22, %c0_23], %45 {strides = array<i32>} : memref<2x32xf32, #tpu.memory_space<vmem>>, vector<2x32xf32>,
      %c0_24 = arith.constant 0 : index
      %c0_25 = arith.constant 0 : index
      %47 = vector.load %arg4[%c0_24, %c0_25] : memref<2x32xf32, #tpu.memory_space<vmem>>, vector<2x32xf32>
      %c0_26 = arith.constant 0 : index
      %c0_27 = arith.constant 0 : index
      %48 = vector.load %arg9[%c0_26, %c0_27] : memref<2x32xf32, #tpu.memory_space<vmem>>, vector<2x32xf32>
      tpu.vector_store %arg9[%c0_26, %c0_27], %47 {strides = array<i32>} : memref<2x32xf32, #tpu.memory_space<vmem>>, vector<2x32xf32>,
    } else {
    }
    %c0 = arith.constant 0 : index
    %c0_1 = arith.constant 0 : index
    %3 = vector.load %arg8[%c0, %c0_1] : memref<2x32xf32, #tpu.memory_space<vmem>>, vector<2x32xf32>
    %c0_2 = arith.constant 0 : index
    %c0_3 = arith.constant 0 : index
    %4 = vector.load %arg9[%c0_2, %c0_3] : memref<2x32xf32, #tpu.memory_space<vmem>>, vector<2x32xf32>
    %5 = arith.truncf %3 : vector<2x32xf32> to vector<2x32xbf16>
    %c0_4 = arith.constant 0 : index
    %c0_5 = arith.constant 0 : index
    %6 = vector.load %arg2[%c0_4, %c0_5] : memref<128x32xbf16, #tpu.memory_space<vmem>>, vector<128x32xbf16>
    %cst = arith.constant dense<0.000000e+00> : vector<2x128xf32>
    %7 = tpu.matmul %5, %6, %cst {dimension_numbers = #tpu.dot_dimension_numbers<[1], [1], [0], [0], [0, 0, 1, 0], [], []>} : vector<2x32xbf16>, vector<128x32xbf16>, vector<2x128xf32> -> vector<2x128xf32>
    %c0_6 = arith.constant 0 : index
    %c0_7 = arith.constant 0 : index
    %c0_8 = arith.constant 0 : index
    %8 = vector.load %arg1[%c0_6, %c0_7, %c0_8] : memref<1x2x128xf32, #tpu.memory_space<vmem>>, vector<1x2x128xf32>
    %9 = vector.shape_cast %8 : vector<1x2x128xf32> to vector<2x128xf32>
    %10 = arith.addf %9, %7 : vector<2x128xf32>
    %11 = vector.extract_strided_slice %10 {offsets = [0, 0], sizes = [2, 32], strides = [1, 1]} : vector<2x128xf32> to vector<2x32xf32>
    %12 = arith.negf %11 : vector<2x32xf32>
    %13 = math.exp %12 : vector<2x32xf32>
    %cst_9 = arith.constant 1.000000e+00 : f32
    %14 = vector.broadcast %cst_9 : f32 to vector<2x32xf32>
    %15 = arith.addf %14, %13 : vector<2x32xf32>
    %16 = arith.divf %14, %15 : vector<2x32xf32>
    %17 = vector.extract_strided_slice %10 {offsets = [0, 32], sizes = [2, 32], strides = [1, 1]} : vector<2x128xf32> to vector<2x32xf32>
    %18 = arith.negf %17 : vector<2x32xf32>
    %19 = math.exp %18 : vector<2x32xf32>
    %cst_10 = arith.constant 1.000000e+00 : f32
    %20 = vector.broadcast %cst_10 : f32 to vector<2x32xf32>
    %21 = arith.addf %20, %19 : vector<2x32xf32>
    %22 = arith.divf %20, %21 : vector<2x32xf32>
    %23 = vector.extract_strided_slice %10 {offsets = [0, 64], sizes = [2, 32], strides = [1, 1]} : vector<2x128xf32> to vector<2x32xf32>
    %24 = math.tanh %23 : vector<2x32xf32>
    %25 = vector.extract_strided_slice %10 {offsets = [0, 96], sizes = [2, 32], strides = [1, 1]} : vector<2x128xf32> to vector<2x32xf32>
    %26 = arith.negf %25 : vector<2x32xf32>
    %27 = math.exp %26 : vector<2x32xf32>
    %cst_11 = arith.constant 1.000000e+00 : f32
    %28 = vector.broadcast %cst_11 : f32 to vector<2x32xf32>
    %29 = arith.addf %28, %27 : vector<2x32xf32>
    %30 = arith.divf %28, %29 : vector<2x32xf32>
    %31 = arith.mulf %22, %4 : vector<2x32xf32>
    %32 = arith.mulf %16, %24 : vector<2x32xf32>
    %33 = arith.addf %31, %32 : vector<2x32xf32>
    %34 = math.tanh %33 : vector<2x32xf32>
    %35 = arith.mulf %30, %34 : vector<2x32xf32>
    %c0_12 = arith.constant 0 : index
    %c0_13 = arith.constant 0 : index
    %36 = vector.load %arg8[%c0_12, %c0_13] : memref<2x32xf32, #tpu.memory_space<vmem>>, vector<2x32xf32>
    tpu.vector_store %arg8[%c0_12, %c0_13], %35 {strides = array<i32>} : memref<2x32xf32, #tpu.memory_space<vmem>>, vector<2x32xf32>,
    %c0_14 = arith.constant 0 : index
    %c0_15 = arith.constant 0 : index
    %37 = vector.load %arg9[%c0_14, %c0_15] : memref<2x32xf32, #tpu.memory_space<vmem>>, vector<2x32xf32>
    tpu.vector_store %arg9[%c0_14, %c0_15], %33 {strides = array<i32>} : memref<2x32xf32, #tpu.memory_space<vmem>>, vector<2x32xf32>,
    %38 = arith.truncf %35 : vector<2x32xf32> to vector<2x32xbf16>
    %c0_16 = arith.constant 0 : index
    %c0_17 = arith.constant 0 : index
    %c0_18 = arith.constant 0 : index
    %39 = vector.load %arg5[%c0_16, %c0_17, %c0_18] : memref<1x2x32xbf16, #tpu.memory_space<vmem>>, vector<1x2x32xbf16>
    %40 = vector.shape_cast %39 : vector<1x2x32xbf16> to vector<2x32xbf16>
    %41 = vector.shape_cast %38 : vector<2x32xbf16> to vector<1x2x32xbf16>
    tpu.vector_store %arg5[%c0_16, %c0_17, %c0_18], %41 {strides = array<i32>} : memref<1x2x32xbf16, #tpu.memory_space<vmem>>, vector<1x2x32xbf16>,
    %c7_i32 = arith.constant 7 : i32
    %42 = arith.cmpi eq, %arg0, %c7_i32 : i32
    %43 = arith.extui %42 : i1 to i32
    %c0_i32_19 = arith.constant 0 : i32
    %44 = arith.cmpi ne, %43, %c0_i32_19 : i32
    scf.if %44 {
      %c0_20 = arith.constant 0 : index
      %c0_21 = arith.constant 0 : index
      %45 = vector.load %arg6[%c0_20, %c0_21] : memref<2x32xf32, #tpu.memory_space<vmem>>, vector<2x32xf32>
      tpu.vector_store %arg6[%c0_20, %c0_21], %35 {strides = array<i32>} : memref<2x32xf32, #tpu.memory_space<vmem>>, vector<2x32xf32>,
      %c0_22 = arith.constant 0 : index
      %c0_23 = arith.constant 0 : index
      %46 = vector.load %arg7[%c0_22, %c0_23] : memref<2x32xf32, #tpu.memory_space<vmem>>, vector<2x32xf32>
      tpu.vector_store %arg7[%c0_22, %c0_23], %33 {strides = array<i32>} : memref<2x32xf32, #tpu.memory_space<vmem>>, vector<2x32xf32>,
    } else {
    }
    return
  }
  func.func @transform_0(%arg0: i32) -> (i32, i32, i32) {
    %c0_i32 = arith.constant 0 : i32
    %c0_i32_0 = arith.constant 0 : i32
    %c0_i32_1 = arith.constant 0 : i32
    return %arg0, %c0_i32, %c0_i32_0 : i32, i32, i32
  }
  func.func @transform_1(%arg0: i32) -> (i32, i32) {
    %c0_i32 = arith.constant 0 : i32
    %c0_i32_0 = arith.constant 0 : i32
    %c0_i32_1 = arith.constant 0 : i32
    return %c0_i32, %c0_i32_0 : i32, i32
  }
  func.func @transform_2(%arg0: i32) -> (i32, i32) {
    %c0_i32 = arith.constant 0 : i32
    %c0_i32_0 = arith.constant 0 : i32
    %c0_i32_1 = arith.constant 0 : i32
    return %c0_i32, %c0_i32_0 : i32, i32
  }
  func.func @transform_3(%arg0: i32) -> (i32, i32) {
    %c0_i32 = arith.constant 0 : i32
    %c0_i32_0 = arith.constant 0 : i32
    %c0_i32_1 = arith.constant 0 : i32
    return %c0_i32, %c0_i32_0 : i32, i32
  }
  func.func @transform_4(%arg0: i32) -> (i32, i32, i32) {
    %c0_i32 = arith.constant 0 : i32
    %c0_i32_0 = arith.constant 0 : i32
    %c0_i32_1 = arith.constant 0 : i32
    return %arg0, %c0_i32, %c0_i32_0 : i32, i32, i32
  }
  func.func @transform_5(%arg0: i32) -> (i32, i32) {
    %c0_i32 = arith.constant 0 : i32
    %c0_i32_0 = arith.constant 0 : i32
    %c0_i32_1 = arith.constant 0 : i32
    return %c0_i32, %c0_i32_0 : i32, i32
  }
  func.func @transform_6(%arg0: i32) -> (i32, i32) {
    %c0_i32 = arith.constant 0 : i32
    %c0_i32_0 = arith.constant 0 : i32
    %c0_i32_1 = arith.constant 0 : i32
    return %c0_i32, %c0_i32_0 : i32, i32
  }
}

module attributes {stable_mosaic.version = 11 : i64} {
  func.func @dense_bias_kernel(%arg0: i32, %arg1: memref<16x32xbf16, #tpu.memory_space<vmem>>, %arg2: memref<128x32xbf16, #tpu.memory_space<vmem>>, %arg3: memref<1x128xf32, #tpu.memory_space<vmem>>, %arg4: memref<16x128xf32, #tpu.memory_space<vmem>>) attributes {dimension_semantics = [#tpu.dimension_semantics<parallel>], iteration_bounds = array<i64: 1>, scalar_prefetch = 0 : i64, scratch_operands = 0 : i64, tpu.core_type = #tpu.core_type<tc>, window_params = [{transform_indices = @transform_0, window_bounds = array<i64: 16, 32>}, {pipeline_mode = #tpu.pipeline_mode<synchronous>, transform_indices = @transform_1, window_bounds = array<i64: 128, 32>}, {pipeline_mode = #tpu.pipeline_mode<synchronous>, transform_indices = @transform_2, window_bounds = array<i64: 1, 128>}, {transform_indices = @transform_3, window_bounds = array<i64: 16, 128>}]} {
    %c0 = arith.constant 0 : index
    %c0_0 = arith.constant 0 : index
    %0 = vector.load %arg1[%c0, %c0_0] : memref<16x32xbf16, #tpu.memory_space<vmem>>, vector<16x32xbf16>
    %c0_1 = arith.constant 0 : index
    %c0_2 = arith.constant 0 : index
    %1 = vector.load %arg2[%c0_1, %c0_2] : memref<128x32xbf16, #tpu.memory_space<vmem>>, vector<128x32xbf16>
    %cst = arith.constant dense<0.000000e+00> : vector<16x128xf32>
    %2 = tpu.matmul %0, %1, %cst {dimension_numbers = #tpu.dot_dimension_numbers<[1], [1], [0], [0], [0, 0, 1, 0], [], []>} : vector<16x32xbf16>, vector<128x32xbf16>, vector<16x128xf32> -> vector<16x128xf32>
    %c0_3 = arith.constant 0 : index
    %c0_4 = arith.constant 0 : index
    %3 = vector.load %arg3[%c0_3, %c0_4] : memref<1x128xf32, #tpu.memory_space<vmem>>, vector<1x128xf32>
    %4 = vector.broadcast %3 : vector<1x128xf32> to vector<16x128xf32>
    %5 = arith.addf %2, %4 : vector<16x128xf32>
    %c0_5 = arith.constant 0 : index
    %c0_6 = arith.constant 0 : index
    %6 = vector.load %arg4[%c0_5, %c0_6] : memref<16x128xf32, #tpu.memory_space<vmem>>, vector<16x128xf32>
    tpu.vector_store %arg4[%c0_5, %c0_6], %5 {strides = array<i32>} : memref<16x128xf32, #tpu.memory_space<vmem>>, vector<16x128xf32>,
    return
  }
  func.func @transform_0(%arg0: i32) -> (i32, i32) {
    %c0_i32 = arith.constant 0 : i32
    %c0_i32_0 = arith.constant 0 : i32
    return %arg0, %c0_i32 : i32, i32
  }
  func.func @transform_1(%arg0: i32) -> (i32, i32) {
    %c0_i32 = arith.constant 0 : i32
    %c0_i32_0 = arith.constant 0 : i32
    %c0_i32_1 = arith.constant 0 : i32
    return %c0_i32, %c0_i32_0 : i32, i32
  }
  func.func @transform_2(%arg0: i32) -> (i32, i32) {
    %c0_i32 = arith.constant 0 : i32
    %c0_i32_0 = arith.constant 0 : i32
    %c0_i32_1 = arith.constant 0 : i32
    return %c0_i32, %c0_i32_0 : i32, i32
  }
  func.func @transform_3(%arg0: i32) -> (i32, i32) {
    %c0_i32 = arith.constant 0 : i32
    %c0_i32_0 = arith.constant 0 : i32
    return %arg0, %c0_i32 : i32, i32
  }
}

module attributes {stable_mosaic.version = 11 : i64} {
  func.func @lstm_recurrence_kernel(%arg0: i32, %arg1: memref<1x2x128xf32, #tpu.memory_space<vmem>>, %arg2: memref<128x32xbf16, #tpu.memory_space<vmem>>, %arg3: memref<2x32xf32, #tpu.memory_space<vmem>>, %arg4: memref<2x32xf32, #tpu.memory_space<vmem>>, %arg5: memref<1x2x32xbf16, #tpu.memory_space<vmem>>, %arg6: memref<2x32xf32, #tpu.memory_space<vmem>>, %arg7: memref<2x32xf32, #tpu.memory_space<vmem>>, %arg8: memref<2x32xf32, #tpu.memory_space<vmem>>, %arg9: memref<2x32xf32, #tpu.memory_space<vmem>>) attributes {dimension_semantics = [#tpu.dimension_semantics<arbitrary>], iteration_bounds = array<i64: 8>, scalar_prefetch = 0 : i64, scratch_operands = 2 : i64, tpu.core_type = #tpu.core_type<tc>, window_params = [{transform_indices = @transform_0, window_bounds = array<i64: 1, 2, 128>}, {pipeline_mode = #tpu.pipeline_mode<synchronous>, transform_indices = @transform_1, window_bounds = array<i64: 128, 32>}, {pipeline_mode = #tpu.pipeline_mode<synchronous>, transform_indices = @transform_2, window_bounds = array<i64: 2, 32>}, {pipeline_mode = #tpu.pipeline_mode<synchronous>, transform_indices = @transform_3, window_bounds = array<i64: 2, 32>}, {transform_indices = @transform_4, window_bounds = array<i64: 1, 2, 32>}, {pipeline_mode = #tpu.pipeline_mode<synchronous>, transform_indices = @transform_5, window_bounds = array<i64: 2, 32>}, {pipeline_mode = #tpu.pipeline_mode<synchronous>, transform_indices = @transform_6, window_bounds = array<i64: 2, 32>}]} {
    %c0_i32 = arith.constant 0 : i32
    %0 = arith.cmpi eq, %arg0, %c0_i32 : i32
    %1 = arith.extui %0 : i1 to i32
    %c0_i32_0 = arith.constant 0 : i32
    %2 = arith.cmpi ne, %1, %c0_i32_0 : i32
    scf.if %2 {
      %c0_20 = arith.constant 0 : index
      %c0_21 = arith.constant 0 : index
      %45 = vector.load %arg3[%c0_20, %c0_21] : memref<2x32xf32, #tpu.memory_space<vmem>>, vector<2x32xf32>
      %c0_22 = arith.constant 0 : index
      %c0_23 = arith.constant 0 : index
      %46 = vector.load %arg8[%c0_22, %c0_23] : memref<2x32xf32, #tpu.memory_space<vmem>>, vector<2x32xf32>
      tpu.vector_store %arg8[%c0_22, %c0_23], %45 {strides = array<i32>} : memref<2x32xf32, #tpu.memory_space<vmem>>, vector<2x32xf32>,
      %c0_24 = arith.constant 0 : index
      %c0_25 = arith.constant 0 : index
      %47 = vector.load %arg4[%c0_24, %c0_25] : memref<2x32xf32, #tpu.memory_space<vmem>>, vector<2x32xf32>
      %c0_26 = arith.constant 0 : index
      %c0_27 = arith.constant 0 : index
      %48 = vector.load %arg9[%c0_26, %c0_27] : memref<2x32xf32, #tpu.memory_space<vmem>>, vector<2x32xf32>
      tpu.vector_store %arg9[%c0_26, %c0_27], %47 {strides = array<i32>} : memref<2x32xf32, #tpu.memory_space<vmem>>, vector<2x32xf32>,
    } else {
    }
    %c0 = arith.constant 0 : index
    %c0_1 = arith.constant 0 : index
    %3 = vector.load %arg8[%c0, %c0_1] : memref<2x32xf32, #tpu.memory_space<vmem>>, vector<2x32xf32>
    %c0_2 = arith.constant 0 : index
    %c0_3 = arith.constant 0 : index
    %4 = vector.load %arg9[%c0_2, %c0_3] : memref<2x32xf32, #tpu.memory_space<vmem>>, vector<2x32xf32>
    %5 = arith.truncf %3 : vector<2x32xf32> to vector<2x32xbf16>
    %c0_4 = arith.constant 0 : index
    %c0_5 = arith.constant 0 : index
    %6 = vector.load %arg2[%c0_4, %c0_5] : memref<128x32xbf16, #tpu.memory_space<vmem>>, vector<128x32xbf16>
    %cst = arith.constant dense<0.000000e+00> : vector<2x128xf32>
    %7 = tpu.matmul %5, %6, %cst {dimension_numbers = #tpu.dot_dimension_numbers<[1], [1], [0], [0], [0, 0, 1, 0], [], []>} : vector<2x32xbf16>, vector<128x32xbf16>, vector<2x128xf32> -> vector<2x128xf32>
    %c0_6 = arith.constant 0 : index
    %c0_7 = arith.constant 0 : index
    %c0_8 = arith.constant 0 : index
    %8 = vector.load %arg1[%c0_6, %c0_7, %c0_8] : memref<1x2x128xf32, #tpu.memory_space<vmem>>, vector<1x2x128xf32>
    %9 = vector.shape_cast %8 : vector<1x2x128xf32> to vector<2x128xf32>
    %10 = arith.addf %9, %7 : vector<2x128xf32>
    %11 = vector.extract_strided_slice %10 {offsets = [0, 0], sizes = [2, 32], strides = [1, 1]} : vector<2x128xf32> to vector<2x32xf32>
    %12 = arith.negf %11 : vector<2x32xf32>
    %13 = math.exp %12 : vector<2x32xf32>
    %cst_9 = arith.constant 1.000000e+00 : f32
    %14 = vector.broadcast %cst_9 : f32 to vector<2x32xf32>
    %15 = arith.addf %14, %13 : vector<2x32xf32>
    %16 = arith.divf %14, %15 : vector<2x32xf32>
    %17 = vector.extract_strided_slice %10 {offsets = [0, 32], sizes = [2, 32], strides = [1, 1]} : vector<2x128xf32> to vector<2x32xf32>
    %18 = arith.negf %17 : vector<2x32xf32>
    %19 = math.exp %18 : vector<2x32xf32>
    %cst_10 = arith.constant 1.000000e+00 : f32
    %20 = vector.broadcast %cst_10 : f32 to vector<2x32xf32>
    %21 = arith.addf %20, %19 : vector<2x32xf32>
    %22 = arith.divf %20, %21 : vector<2x32xf32>
    %23 = vector.extract_strided_slice %10 {offsets = [0, 64], sizes = [2, 32], strides = [1, 1]} : vector<2x128xf32> to vector<2x32xf32>
    %24 = math.tanh %23 : vector<2x32xf32>
    %25 = vector.extract_strided_slice %10 {offsets = [0, 96], sizes = [2, 32], strides = [1, 1]} : vector<2x128xf32> to vector<2x32xf32>
    %26 = arith.negf %25 : vector<2x32xf32>
    %27 = math.exp %26 : vector<2x32xf32>
    %cst_11 = arith.constant 1.000000e+00 : f32
    %28 = vector.broadcast %cst_11 : f32 to vector<2x32xf32>
    %29 = arith.addf %28, %27 : vector<2x32xf32>
    %30 = arith.divf %28, %29 : vector<2x32xf32>
    %31 = arith.mulf %22, %4 : vector<2x32xf32>
    %32 = arith.mulf %16, %24 : vector<2x32xf32>
    %33 = arith.addf %31, %32 : vector<2x32xf32>
    %34 = math.tanh %33 : vector<2x32xf32>
    %35 = arith.mulf %30, %34 : vector<2x32xf32>
    %c0_12 = arith.constant 0 : index
    %c0_13 = arith.constant 0 : index
    %36 = vector.load %arg8[%c0_12, %c0_13] : memref<2x32xf32, #tpu.memory_space<vmem>>, vector<2x32xf32>
    tpu.vector_store %arg8[%c0_12, %c0_13], %35 {strides = array<i32>} : memref<2x32xf32, #tpu.memory_space<vmem>>, vector<2x32xf32>,
    %c0_14 = arith.constant 0 : index
    %c0_15 = arith.constant 0 : index
    %37 = vector.load %arg9[%c0_14, %c0_15] : memref<2x32xf32, #tpu.memory_space<vmem>>, vector<2x32xf32>
    tpu.vector_store %arg9[%c0_14, %c0_15], %33 {strides = array<i32>} : memref<2x32xf32, #tpu.memory_space<vmem>>, vector<2x32xf32>,
    %38 = arith.truncf %35 : vector<2x32xf32> to vector<2x32xbf16>
    %c0_16 = arith.constant 0 : index
    %c0_17 = arith.constant 0 : index
    %c0_18 = arith.constant 0 : index
    %39 = vector.load %arg5[%c0_16, %c0_17, %c0_18] : memref<1x2x32xbf16, #tpu.memory_space<vmem>>, vector<1x2x32xbf16>
    %40 = vector.shape_cast %39 : vector<1x2x32xbf16> to vector<2x32xbf16>
    %41 = vector.shape_cast %38 : vector<2x32xbf16> to vector<1x2x32xbf16>
    tpu.vector_store %arg5[%c0_16, %c0_17, %c0_18], %41 {strides = array<i32>} : memref<1x2x32xbf16, #tpu.memory_space<vmem>>, vector<1x2x32xbf16>,
    %c7_i32 = arith.constant 7 : i32
    %42 = arith.cmpi eq, %arg0, %c7_i32 : i32
    %43 = arith.extui %42 : i1 to i32
    %c0_i32_19 = arith.constant 0 : i32
    %44 = arith.cmpi ne, %43, %c0_i32_19 : i32
    scf.if %44 {
      %c0_20 = arith.constant 0 : index
      %c0_21 = arith.constant 0 : index
      %45 = vector.load %arg6[%c0_20, %c0_21] : memref<2x32xf32, #tpu.memory_space<vmem>>, vector<2x32xf32>
      tpu.vector_store %arg6[%c0_20, %c0_21], %35 {strides = array<i32>} : memref<2x32xf32, #tpu.memory_space<vmem>>, vector<2x32xf32>,
      %c0_22 = arith.constant 0 : index
      %c0_23 = arith.constant 0 : index
      %46 = vector.load %arg7[%c0_22, %c0_23] : memref<2x32xf32, #tpu.memory_space<vmem>>, vector<2x32xf32>
      tpu.vector_store %arg7[%c0_22, %c0_23], %33 {strides = array<i32>} : memref<2x32xf32, #tpu.memory_space<vmem>>, vector<2x32xf32>,
    } else {
    }
    return
  }
  func.func @transform_0(%arg0: i32) -> (i32, i32, i32) {
    %c0_i32 = arith.constant 0 : i32
    %c0_i32_0 = arith.constant 0 : i32
    %c0_i32_1 = arith.constant 0 : i32
    return %arg0, %c0_i32, %c0_i32_0 : i32, i32, i32
  }
  func.func @transform_1(%arg0: i32) -> (i32, i32) {
    %c0_i32 = arith.constant 0 : i32
    %c0_i32_0 = arith.constant 0 : i32
    %c0_i32_1 = arith.constant 0 : i32
    return %c0_i32, %c0_i32_0 : i32, i32
  }
  func.func @transform_2(%arg0: i32) -> (i32, i32) {
    %c0_i32 = arith.constant 0 : i32
    %c0_i32_0 = arith.constant 0 : i32
    %c0_i32_1 = arith.constant 0 : i32
    return %c0_i32, %c0_i32_0 : i32, i32
  }
  func.func @transform_3(%arg0: i32) -> (i32, i32) {
    %c0_i32 = arith.constant 0 : i32
    %c0_i32_0 = arith.constant 0 : i32
    %c0_i32_1 = arith.constant 0 : i32
    return %c0_i32, %c0_i32_0 : i32, i32
  }
  func.func @transform_4(%arg0: i32) -> (i32, i32, i32) {
    %c0_i32 = arith.constant 0 : i32
    %c0_i32_0 = arith.constant 0 : i32
    %c0_i32_1 = arith.constant 0 : i32
    return %arg0, %c0_i32, %c0_i32_0 : i32, i32, i32
  }
  func.func @transform_5(%arg0: i32) -> (i32, i32) {
    %c0_i32 = arith.constant 0 : i32
    %c0_i32_0 = arith.constant 0 : i32
    %c0_i32_1 = arith.constant 0 : i32
    return %c0_i32, %c0_i32_0 : i32, i32
  }
  func.func @transform_6(%arg0: i32) -> (i32, i32) {
    %c0_i32 = arith.constant 0 : i32
    %c0_i32_0 = arith.constant 0 : i32
    %c0_i32_1 = arith.constant 0 : i32
    return %c0_i32, %c0_i32_0 : i32, i32
  }
}

module attributes {stable_mosaic.version = 11 : i64} {
  func.func @dense_logsoftmax_kernel(%arg0: i32, %arg1: memref<16x32xbf16, #tpu.memory_space<vmem>>, %arg2: memref<16x32xbf16, #tpu.memory_space<vmem>>, %arg3: memref<1x16xf32, #tpu.memory_space<vmem>>, %arg4: memref<16x16xf32, #tpu.memory_space<vmem>>) attributes {dimension_semantics = [#tpu.dimension_semantics<parallel>], iteration_bounds = array<i64: 1>, scalar_prefetch = 0 : i64, scratch_operands = 0 : i64, tpu.core_type = #tpu.core_type<tc>, window_params = [{transform_indices = @transform_0, window_bounds = array<i64: 16, 32>}, {pipeline_mode = #tpu.pipeline_mode<synchronous>, transform_indices = @transform_1, window_bounds = array<i64: 16, 32>}, {pipeline_mode = #tpu.pipeline_mode<synchronous>, transform_indices = @transform_2, window_bounds = array<i64: 1, 16>}, {transform_indices = @transform_3, window_bounds = array<i64: 16, 16>}]} {
    %c0 = arith.constant 0 : index
    %c0_0 = arith.constant 0 : index
    %0 = vector.load %arg1[%c0, %c0_0] : memref<16x32xbf16, #tpu.memory_space<vmem>>, vector<16x32xbf16>
    %c0_1 = arith.constant 0 : index
    %c0_2 = arith.constant 0 : index
    %1 = vector.load %arg2[%c0_1, %c0_2] : memref<16x32xbf16, #tpu.memory_space<vmem>>, vector<16x32xbf16>
    %cst = arith.constant dense<0.000000e+00> : vector<16x16xf32>
    %2 = tpu.matmul %0, %1, %cst {dimension_numbers = #tpu.dot_dimension_numbers<[1], [1], [0], [0], [0, 0, 1, 0], [], []>} : vector<16x32xbf16>, vector<16x32xbf16>, vector<16x16xf32> -> vector<16x16xf32>
    %c0_3 = arith.constant 0 : index
    %c0_4 = arith.constant 0 : index
    %3 = vector.load %arg3[%c0_3, %c0_4] : memref<1x16xf32, #tpu.memory_space<vmem>>, vector<1x16xf32>
    %4 = vector.broadcast %3 : vector<1x16xf32> to vector<16x16xf32>
    %5 = arith.addf %2, %4 : vector<16x16xf32>
    %cst_5 = arith.constant dense<0xFF800000> : vector<16xf32>
    %6 = vector.multi_reduction <maximumf>, %5, %cst_5 [1] : vector<16x16xf32> to vector<16xf32>
    %7 = vector.shape_cast %6 : vector<16xf32> to vector<16x1xf32>
    %8 = vector.broadcast %7 : vector<16x1xf32> to vector<16x16xf32>
    %9 = arith.subf %5, %8 : vector<16x16xf32>
    %10 = math.exp %9 : vector<16x16xf32>
    %cst_6 = arith.constant dense<0.000000e+00> : vector<16xf32>
    %11 = vector.multi_reduction <add>, %10, %cst_6 [1] : vector<16x16xf32> to vector<16xf32>
    %12 = vector.shape_cast %11 : vector<16xf32> to vector<16x1xf32>
    %13 = math.log %12 : vector<16x1xf32>
    %14 = vector.broadcast %13 : vector<16x1xf32> to vector<16x16xf32>
    %15 = arith.subf %9, %14 : vector<16x16xf32>
    %c0_7 = arith.constant 0 : index
    %c0_8 = arith.constant 0 : index
    %16 = vector.load %arg4[%c0_7, %c0_8] : memref<16x16xf32, #tpu.memory_space<vmem>>, vector<16x16xf32>
    tpu.vector_store %arg4[%c0_7, %c0_8], %15 {strides = array<i32>} : memref<16x16xf32, #tpu.memory_space<vmem>>, vector<16x16xf32>,
    return
  }
  func.func @transform_0(%arg0: i32) -> (i32, i32) {
    %c0_i32 = arith.constant 0 : i32
    %c0_i32_0 = arith.constant 0 : i32
    return %arg0, %c0_i32 : i32, i32
  }
  func.func @transform_1(%arg0: i32) -> (i32, i32) {
    %c0_i32 = arith.constant 0 : i32
    %c0_i32_0 = arith.constant 0 : i32
    %c0_i32_1 = arith.constant 0 : i32
    return %c0_i32, %c0_i32_0 : i32, i32
  }
  func.func @transform_2(%arg0: i32) -> (i32, i32) {
    %c0_i32 = arith.constant 0 : i32
    %c0_i32_0 = arith.constant 0 : i32
    %c0_i32_1 = arith.constant 0 : i32
    return %c0_i32, %c0_i32_0 : i32, i32
  }
  func.func @transform_3(%arg0: i32) -> (i32, i32) {
    %c0_i32 = arith.constant 0 : i32
    %c0_i32_0 = arith.constant 0 : i32
    return %arg0, %c0_i32 : i32, i32
  }
}

</mosaic_0001>

<llo_original>
// kernel: _lambda_.6
$region0: #{_lambda_.6}
  #allocation0 [shape = 'u32[]', space=smem, size = 0x4, offset = 0x4, fixed_abs, tag = 'smem constant byte address 0x4 - core index']
  #allocation1 [shape = 'u32[144,128]{1,0:T(1,128)}', space=vmem, size = 0x12000, scoped, tag = 'internal scratch']
  #allocation2 [shape = 'f32[2,32]{1,0:T(2,128)}', space=vmem, size = 0x400, scoped, tag = 'scratch operand']
  #allocation3 [shape = 'f32[2,32]{1,0:T(2,128)}', space=vmem, size = 0x400, scoped, tag = 'scratch operand']
  %s0 = inlined_call_operand.vmem [shape: f32[8,2,128], index: 0, kind: input, shape index: {}]
  %s1 = inlined_call_operand.vmem [shape: bf16[128,32], index: 1, kind: input, shape index: {}]
  %s2 = inlined_call_operand.vmem [shape: f32[2,32], index: 2, kind: input, shape index: {}, may-alias: {2,3}]
  %s3 = inlined_call_operand.vmem [shape: f32[2,32], index: 3, kind: input, shape index: {}, may-alias: {2,3}]
  %s4 = inlined_call_operand.hbm [shape: bf16[8,2,32], index: 4, kind: output, shape index: {0}]
  %s5 = inlined_call_operand.vmem [shape: f32[2,32], index: 5, kind: output, shape index: {1}]
  %s6 = inlined_call_operand.vmem [shape: f32[2,32], index: 6, kind: output, shape index: {2}]
  %7 = xla_tuple %s4, %s5, %s6
  %s8 = sld [smem:[#allocation0]]
  $region73: #{_lambda_.6} parent=0
    _
  %s10 = ssub.s32 1, %s8
  %s11 = scalar_select 0, %s10, %s8
  $region1: #{_lambda_.6} parent=0
    #allocation4 [shape = 'u8[1024]{0}', space=vmem, size = 0x400, scoped, tag = 'output window, operand 0']
    #allocation5 [shape = 's32[2]{0}', space=sflag, size = 0x8, scoped, tag = 'scoped memory for _lambda_.6']
    %12 = vsyncpa [#allocation5], 0
    %s13 = scalar_lea.sflag [#allocation5], 1
    %14 = vsyncpa %s13, 0
    loop: start=0, step=1, limit=10
    $region2: #{_lambda_.6} parent=1 // loop_pre_header
      _
    $region3: #{_lambda_.6} parent=1 // loop_header
      %s16 = sphi 0, %s20
      %p17 = scmp.ge.s32.totalorder %s16, 10
      %s26 = sphi 0, %s28
      %s29 = sphi 0, %s26
      %s30 = sphi 0, %s29
      %s46 = sphi 0, %s30
      %s50 = sphi 0, %s50
      %s52 = sphi 0, %s50
      %s53 = sphi 0, %s52
      %s67 = sphi 0, %s53
      %s71 = sphi 0, %s71
      %s73 = sphi 0, %s71
      %s74 = sphi 0, %s73
      %s88 = sphi 0, %s74
      %s92 = sphi 0, %s92
      %s94 = sphi 0, %s92
      %s95 = sphi 0, %s94
      %s109 = sphi 0, %s95
      %s115 = sphi 0, %s117
      %s118 = sphi 0, %s115
      %s119 = sphi 0, %s118
      %s135 = sphi 0, %s119
      %s139 = sphi 0, %s139
      %s141 = sphi 0, %s139
      %s142 = sphi 0, %s141
      %s156 = sphi 0, %s142
      %s160 = sphi 0, %s160
      %s162 = sphi 0, %s160
      %s163 = sphi 0, %s162
      %s177 = sphi 0, %s163
    $region4: #{_lambda_.6} parent=1 // loop_header_branch
      %19 = sbr.rel (%p17) target = $region8
    $region5: #{_lambda_.6} parent=1 // loop_body
      %s21 = ssub.s32 %s16, 1
      %s22 = ssub.s32 %s16, 2
      %s23 = sadd.s32 %s16, 1
      %s24 = ssub.s32 %s16, %s23
      %p25 = scmp.eq.s32.totalorder %s24, 0
      %s27 = sadd.s32 %s26, 1
      %s28 = scalar_select %p25, %s26, %s27
      %p31 = pneg %p25
      %p32 = scmp.eq.s32.totalorder %s16, 7
      %p33 = por %p31, %p32
      %p34 = scmp.ne.s32.totalorder %s26, %s29
      %p35 = scmp.eq.s32.totalorder %s16, 0
      %p36 = por %p34, %p35
      %p37 = scmp.ne.s32.totalorder %s26, %s29
      %p38 = scmp.eq.s32.totalorder %s21, 7
      %p39 = por %p37, %p38
      %p40 = scmp.ne.s32.totalorder %s29, %s30
      %p41 = scmp.eq.s32.totalorder %s21, 0
      %p42 = por %p40, %p41
      %p43 = scmp.ne.s32.totalorder %s29, %s30
      %p44 = scmp.eq.s32.totalorder %s22, 7
      %p45 = por %p43, %p44
      %p47 = scmp.ne.s32.totalorder %s30, %s46
      %p48 = scmp.eq.s32.totalorder %s22, 0
      %p49 = por %p47, %p48
      %s51 = sadd.s32 %s50, 1
      %p54 = scmp.eq.s32.totalorder %s16, 7
      %p55 = scmp.ne.s32.totalorder %s50, %s52
      %p56 = scmp.eq.s32.totalorder %s16, 0
      %p57 = por %p55, %p56
      %p58 = scmp.ne.s32.totalorder %s50, %s52
      %p59 = scmp.eq.s32.totalorder %s21, 7
      %p60 = por %p58, %p59
      %p61 = scmp.ne.s32.totalorder %s52, %s53
      %p62 = scmp.eq.s32.totalorder %s21, 0
      %p63 = por %p61, %p62
      %p64 = scmp.ne.s32.totalorder %s52, %s53
      %p65 = scmp.eq.s32.totalorder %s22, 7
      %p66 = por %p64, %p65
      %p68 = scmp.ne.s32.totalorder %s53, %s67
      %p69 = scmp.eq.s32.totalorder %s22, 0
      %p70 = por %p68, %p69
      %s72 = sadd.s32 %s71, 1
      %p75 = scmp.eq.s32.totalorder %s16, 7
      %p76 = scmp.ne.s32.totalorder %s71, %s73
      %p77 = scmp.eq.s32.totalorder %s16, 0
      %p78 = por %p76, %p77
      %p79 = scmp.ne.s32.totalorder %s71, %s73
      %p80 = scmp.eq.s32.totalorder %s21, 7
      %p81 = por %p79, %p80
      %p82 = scmp.ne.s32.totalorder %s73, %s74
      %p83 = scmp.eq.s32.totalorder %s21, 0
      %p84 = por %p82, %p83
      %p85 = scmp.ne.s32.totalorder %s73, %s74
      %p86 = scmp.eq.s32.totalorder %s22, 7
      %p87 = por %p85, %p86
      %p89 = scmp.ne.s32.totalorder %s74, %s88
      %p90 = scmp.eq.s32.totalorder %s22, 0
      %p91 = por %p89, %p90
      %s93 = sadd.s32 %s92, 1
      %p96 = scmp.eq.s32.totalorder %s16, 7
      %p97 = scmp.ne.s32.totalorder %s92, %s94
      %p98 = scmp.eq.s32.totalorder %s16, 0
      %p99 = por %p97, %p98
      %p100 = scmp.ne.s32.totalorder %s92, %s94
      %p101 = scmp.eq.s32.totalorder %s21, 7
      %p102 = por %p100, %p101
      %p103 = scmp.ne.s32.totalorder %s94, %s95
      %p104 = scmp.eq.s32.totalorder %s21, 0
      %p105 = por %p103, %p104
      %p106 = scmp.ne.s32.totalorder %s94, %s95
      %p107 = scmp.eq.s32.totalorder %s22, 7
      %p108 = por %p106, %p107
      %p110 = scmp.ne.s32.totalorder %s95, %s109
      %p111 = scmp.eq.s32.totalorder %s22, 0
      %p112 = por %p110, %p111
      %s113 = ssub.s32 %s16, %s23
      %p114 = scmp.eq.s32.totalorder %s113, 0
      %s116 = sadd.s32 %s115, 1
      %s117 = scalar_select %p114, %s115, %s116
      %p120 = pneg %p114
      %p121 = scmp.eq.s32.totalorder %s16, 7
      %p122 = por %p120, %p121
      %p123 = scmp.ne.s32.totalorder %s115, %s118
      %p124 = scmp.eq.s32.totalorder %s16, 0
      %p125 = por %p123, %p124
      %p126 = scmp.ne.s32.totalorder %s115, %s118
      %p127 = scmp.eq.s32.totalorder %s21, 7
      %p128 = por %p126, %p127
      %p129 = scmp.ne.s32.totalorder %s118, %s119
      %p130 = scmp.eq.s32.totalorder %s21, 0
      %p131 = por %p129, %p130
      %p132 = scmp.ne.s32.totalorder %s118, %s119
      %p133 = scmp.eq.s32.totalorder %s22, 7
      %p134 = por %p132, %p133
      %p136 = scmp.ne.s32.totalorder %s119, %s135
      %p137 = scmp.eq.s32.totalorder %s22, 0
      %p138 = por %p136, %p137
      %s140 = sadd.s32 %s139, 1
      %p143 = scmp.eq.s32.totalorder %s16, 7
      %p144 = scmp.ne.s32.totalorder %s139, %s141
      %p145 = scmp.eq.s32.totalorder %s16, 0
      %p146 = por %p144, %p145
      %p147 = scmp.ne.s32.totalorder %s139, %s141
      %p148 = scmp.eq.s32.totalorder %s21, 7
      %p149 = por %p147, %p148
      %p150 = scmp.ne.s32.totalorder %s141, %s142
      %p151 = scmp.eq.s32.totalorder %s21, 0
      %p152 = por %p150, %p151
      %p153 = scmp.ne.s32.totalorder %s141, %s142
      %p154 = scmp.eq.s32.totalorder %s22, 7
      %p155 = por %p153, %p154
      %p157 = scmp.ne.s32.totalorder %s142, %s156
      %p158 = scmp.eq.s32.totalorder %s22, 0
      %p159 = por %p157, %p158
      %s161 = sadd.s32 %s160, 1
      %p164 = scmp.eq.s32.totalorder %s16, 7
      %p165 = scmp.ne.s32.totalorder %s160, %s162
      %p166 = scmp.eq.s32.totalorder %s16, 0
      %p167 = por %p165, %p166
      %p168 = scmp.ne.s32.totalorder %s160, %s162
      %p169 = scmp.eq.s32.totalorder %s21, 7
      %p170 = por %p168, %p169
      %p171 = scmp.ne.s32.totalorder %s162, %s163
      %p172 = scmp.eq.s32.totalorder %s21, 0
      %p173 = por %p171, %p172
      %p174 = scmp.ne.s32.totalorder %s162, %s163
      %p175 = scmp.eq.s32.totalorder %s22, 7
      %p176 = por %p174, %p175
      %p178 = scmp.ne.s32.totalorder %s163, %s177
      %p179 = scmp.eq.s32.totalorder %s22, 0
      %p180 = por %p178, %p179
      %p181 = scmp.le.s32.totalorder 1, %s16
      %p182 = scmp.lt.s32.totalorder %s16, 9
      %p183 = pnand %p181, %p182
      %p184 = pneg %p183
      // Predicated region
      $region9: #{_lambda_.6} parent=5 // pred_check
        _
      $region10: #{_lambda_.6} parent=5 // pred_check_branch
        %186 = sbr.rel (%p183) target = $region12
      $region11: #{_lambda_.6} parent=5 // pred_region
        %s187 = ssub.s32 %s16, 1
        // Predicated region
        $region13: #{_lambda_.6} parent=11 // pred_check
          %p188 = pneg %p63
        $region14: #{_lambda_.6} parent=11 // pred_check_branch
          %190 = sbr.rel (%p188) target = $region16
        $region15: #{_lambda_.6} parent=11 // pred_region
          _
        $region16: #{_lambda_.6} parent=11 // pred_fallthru
          _
        // Predicated region
        $region17: #{_lambda_.6} parent=11 // pred_check
          %p191 = pneg %p84
        $region18: #{_lambda_.6} parent=11 // pred_check_branch
          %193 = sbr.rel (%p191) target = $region20
        $region19: #{_lambda_.6} parent=11 // pred_region
          _
        $region20: #{_lambda_.6} parent=11 // pred_fallthru
          _
        // Predicated region
        $region21: #{_lambda_.6} parent=11 // pred_check
          %p194 = pneg %p105
        $region22: #{_lambda_.6} parent=11 // pred_check_branch
          %196 = sbr.rel (%p194) target = $region24
        $region23: #{_lambda_.6} parent=11 // pred_region
          _
        $region24: #{_lambda_.6} parent=11 // pred_fallthru
          _
      $region12: #{_lambda_.6} parent=5 // pred_fallthru
        _
      %p197 = scmp.lt.s32.totalorder %s16, 8
      // Predicated region
      $region25: #{_lambda_.6} parent=5 // pred_check
        %p198 = pneg %p197
      $region26: #{_lambda_.6} parent=5 // pred_check_branch
        %200 = sbr.rel (%p198) target = $region28
      $region27: #{_lambda_.6} parent=5 // pred_region
        // Predicated region
        $region29: #{_lambda_.6} parent=27 // pred_check
          %p201 = pneg %p36
        $region30: #{_lambda_.6} parent=27 // pred_check_branch
          %203 = sbr.rel (%p201) target = $region32
        $region31: #{_lambda_.6} parent=27 // pred_region
          %p204 = scmp.lt.s32.totalorder %s16, 7
          %s205 = scalar_select %p204, %s16, 7
          %s206 = smul.addr %s205, 2
          %s207 = scalar_lea.vmem %s0, %s206
        $region32: #{_lambda_.6} parent=27 // pred_fallthru
          _
      $region28: #{_lambda_.6} parent=5 // pred_fallthru
        _
      %p208 = scmp.le.s32.totalorder 1, %s16
      %p209 = scmp.lt.s32.totalorder %s16, 9
      %p210 = pnand %p208, %p209
      %p211 = pneg %p210
      // Predicated region
      $region33: #{_lambda_.6} parent=5 // pred_check
        _
      $region34: #{_lambda_.6} parent=5 // pred_check_branch
        %213 = sbr.rel (%p210) target = $region36
      $region35: #{_lambda_.6} parent=5 // pred_region
        %s214 = ssub.s32 %s16, 1
        %p215 = scmp.lt.s32.totalorder %s21, 7
        %s216 = scalar_select %p215, %s21, 7
        %s217 = smul.addr %s216, 2
        %s218 = scalar_lea.vmem %s0, %s217
        %p219 = pneg %p42
        %p220 = pneg %p39
        %p221 = pneg %p63
        %p222 = pneg %p60
        %p223 = pneg %p84
        %p224 = pneg %p81
        %p225 = pneg %p105
        %p226 = pneg %p102
        %p227 = pneg %p131
        %p228 = pneg %p128
        %s229 = sand.u32 %s118, 1
        %s230 = scalar_lea.sflag [#allocation5], %s229
        %s231 = sand.u32 %s118, 1
        %s232 = scalar_lea.vmem [#allocation4], %s231
        %p233 = pneg %p152
        %p234 = pneg %p149
        %p235 = pneg %p173
        %p236 = pneg %p170
        %p237 = scmp.lt.s32.totalorder %s21, 7
        %s238 = scalar_select %p237, %s21, 7
        %s239 = smul.addr %s238, 2
        %s240 = scalar_lea.vmem %s0, %s239
        %p242 = scmp.eq.s32.totalorder %s21, 0
        // Predicated region
        $region37: #{_lambda_.6} parent=35 // pred_check
          %p243 = pneg %p242
        $region38: #{_lambda_.6} parent=35 // pred_check_branch
          %245 = sbr.rel (%p243) target = $region40
        $region39: #{_lambda_.6} parent=35 // pred_region
          %v246 = vld [vmem:[%s2] sm:$0x3]
          %vm247 = vcmask 254976
          %248 = vst.msk [vmem:[#allocation2] sm:$0x3] %vm247, %v246
          %v249 = vld [vmem:[%s3] sm:$0x3]
          %250 = vst.msk [vmem:[#allocation3] sm:$0x3] %vm247, %v249
        $region40: #{_lambda_.6} parent=35 // pred_fallthru
          _
        %v251 = vld [vmem:[#allocation2] sm:$0x3]
        %v252 = vld [vmem:[#allocation3] sm:$0x3]
        %v253 = vpack.c.bf16 %v251, %v251
        %v254 = vld [vmem:[%s1] sm:$0xf]
        %v255 = vld [vmem:[%s1 + $0x4] sm:$0xf]
        %v256 = vld [vmem:[%s1 + $0x8] sm:$0xf]
        %v257 = vld [vmem:[%s1 + $0xc] sm:$0xf]
        %v258 = vld [vmem:[%s1 + $0x10] sm:$0xf]
        %v259 = vld [vmem:[%s1 + $0x14] sm:$0xf]
        %v260 = vld [vmem:[%s1 + $0x18] sm:$0xf]
        %v261 = vld [vmem:[%s1 + $0x1c] sm:$0xf]
        %v262 = vld [vmem:[%s1 + $0x20] sm:$0xf]
        %v263 = vld [vmem:[%s1 + $0x24] sm:$0xf]
        %v264 = vld [vmem:[%s1 + $0x28] sm:$0xf]
        %v265 = vld [vmem:[%s1 + $0x2c] sm:$0xf]
        %v266 = vld [vmem:[%s1 + $0x30] sm:$0xf]
        %v267 = vld [vmem:[%s1 + $0x34] sm:$0xf]
        %v268 = vld [vmem:[%s1 + $0x38] sm:$0xf]
        %v269 = vld [vmem:[%s1 + $0x3c] sm:$0xf]
        %v286 = vunpack.c.l.b16 %v254
        %v287 = vunpack.c.l.b16 %v255
        %v288 = vunpack.c.l.b16 %v256
        %v289 = vunpack.c.l.b16 %v257
        %v290 = vunpack.c.l.b16 %v258
        %v291 = vunpack.c.l.b16 %v259
        %v292 = vunpack.c.l.b16 %v260
        %v293 = vunpack.c.l.b16 %v261
        %v294 = vunpack.c.l.b16 %v262
        %v295 = vunpack.c.l.b16 %v263
        %v296 = vunpack.c.l.b16 %v264
        %v297 = vunpack.c.l.b16 %v265
        %v298 = vunpack.c.l.b16 %v266
        %v299 = vunpack.c.l.b16 %v267
        %v300 = vunpack.c.l.b16 %v268
        %v301 = vunpack.c.l.b16 %v269
        %v302 = vpack.c.b16 %v287, %v286
        %v303 = vpack.c.b16 %v289, %v288
        %v304 = vpack.c.b16 %v291, %v290
        %v305 = vpack.c.b16 %v293, %v292
        %v306 = vpack.c.b16 %v295, %v294
        %v307 = vpack.c.b16 %v297, %v296
        %v308 = vpack.c.b16 %v299, %v298
        %v309 = vpack.c.b16 %v301, %v300
        %vm310 = vcmask 261120
        %v312 = vsel %vm310, %v253, 0
        %v315 = vsel %vm310, %v302, 0
        %v318 = vsel %vm310, %v303, 0
        %v321 = vsel %vm310, %v304, 0
        %v324 = vsel %vm310, %v305, 0
        %v327 = vsel %vm310, %v306, 0
        %v330 = vsel %vm310, %v307, 0
        %v333 = vsel %vm310, %v308, 0
        %v336 = vsel %vm310, %v309, 0
        %338 = vmatprep.subr.bf16.mxu0 0
        %339 = vmatpush1.bf16.xpose.msra.mxu0 %v336
        %340 = vmatprep.subr.bf16.mxu0 0
        %341 = vmatpush1.bf16.xpose.msra.mxu0 %v333
        %342 = vmatprep.subr.bf16.mxu0 0
        %343 = vmatpush1.bf16.xpose.msra.mxu0 %v330
        %344 = vmatprep.subr.bf16.mxu0 0
        %345 = vmatpush1.bf16.xpose.msra.mxu0 %v327
        %346 = vmatprep.subr.bf16.mxu0 0
        %347 = vmatpush1.bf16.xpose.msra.mxu0 %v324
        %348 = vmatprep.subr.bf16.mxu0 0
        %349 = vmatpush1.bf16.xpose.msra.mxu0 %v321
        %350 = vmatprep.subr.bf16.mxu0 0
        %351 = vmatpush1.bf16.xpose.msra.mxu0 %v318
        %352 = vmatprep.subr.bf16.mxu0 0
        %353 = vmatpush1.bf16.xpose.msra.mxu0 %v315
        %354 = vmatprep.subr.bf16.mxu0 0
        %355 = vmatpush2.bf16.xpose.msra.mxu0 0
        %356 = vmatprep.subr.bf16.mxu0 0
        %357 = vmatpush2.bf16.xpose.msra.mxu0 0
        %358 = vmatprep.subr.bf16.mxu0 0
        %359 = vmatpush2.bf16.xpose.msra.mxu0 0
        %360 = vmatprep.subr.bf16.mxu0 0
        %361 = vmatpush2.bf16.xpose.msra.mxu0 0
        %362 = vmatprep.subr.bf16.mxu0 0
        %363 = vmatpush2.bf16.xpose.msra.mxu0 0
        %364 = vmatprep.subr.bf16.mxu0 0
        %365 = vmatpush2.bf16.xpose.msra.mxu0 0
        %366 = vmatprep.subr.bf16.mxu0 0
        %367 = vmatpush2.bf16.xpose.msra.mxu0 0
        %368 = vmatprep.subr.bf16.mxu0 0
        %369 = vmatpush2.bf16.xpose.msra.mxu0 0
        %370 = vmatprep.mubr.bf16.mxu0 0
        %371 = vmatmul.mubr.bf16.gmra.mxu0 %v312
        %v372 = vpop.f32.mrf.mxu0
        %v373 = vadd.f32 0.0, %v372
        %v374 = vpop.f32.mrf.mxu0
        %v375 = vpop.f32.mrf.mxu0
        %v376 = vpop.f32.mrf.mxu0
        %377 = vdwg.mxu0
        %v378 = vld [vmem:[%s240] sm:$0x3]
        %v379 = vadd.f32 %v378, %v373
        %v380 = vxor.u32 %v379, 2147483648
        %v381 = vmul.f32 %v380, 1.442695
        %v382 = vpow.pop %v381
        %v383 = vadd.f32 %v382, 1.0
        %v384 = vrcp.pop %v383
        %v385 = vmul.f32 1.0, %v384
        %v386 = vtanh.pop %v379
        %388 = vrot.lane.b32.xlu0 %v252, 32
        %v389 = vpop.permute.xlu0 %388
        %v391 = vmul.f32 %v385, %v389
        %393 = vrot.lane.b32.xlu0 %v386, 64
        %v394 = vpop.permute.xlu0 %393
        %v396 = vmul.f32 %v385, %v394
        %398 = vrot.lane.b32.xlu0 %v396, 32
        %v399 = vpop.permute.xlu0 %398
        %v401 = vadd.f32 %v391, %v399
        %v402 = vtanh.pop %v401
        %404 = vrot.lane.b32.xlu0 %v402, 64
        %v405 = vpop.permute.xlu0 %404
        %v407 = vmul.f32 %v385, %v405
        %409 = vrot.lane.b32.xlu0 %v407, 32
        %v410 = vpop.permute.xlu0 %409
        %vm412 = vcmask 254976
        %413 = vst.msk [vmem:[#allocation2] sm:$0x3] %vm412, %v410
        %415 = vrot.lane.b32.xlu0 %v401, 96
        %v416 = vpop.permute.xlu0 %415
        %418 = vst.msk [vmem:[#allocation3] sm:$0x3] %vm412, %v416
        %v419 = vpack.c.bf16 %v407, %v407
        %v422 = vunpack.c.l.s4 1966171168
        %v423 = vunpack.c.0.s8 %v422
        %v424 = vlaneseq
        %v425 = vshrl.u32 %v424, 7
        %v426 = vsub.s32 %v423, %v425
        %v427 = vrot.slane %v419, %v426
        %v429 = vunpack.c.l.s4 1966171168
        %v430 = vunpack.c.0.s8 %v429
        %v431 = vlaneseq
        %v432 = vshrl.u32 %v431, 7
        %v433 = vsub.s32 %v430, %v432
        %v434 = vrot.slane %v427, %v433
        %435 = vrot.lane.b32.xlu0 %v434, 32
        %v436 = vpop.permute.xlu0 %435
        %vm438 = vcmask 253952
        %439 = vst.msk [vmem:[%s232] sm:$0x1] %vm438, %v436
        %p440 = scmp.eq.s32.totalorder %s21, 7
        // Predicated region
        $region41: #{_lambda_.6} parent=35 // pred_check
          %p441 = pneg %p440
        $region42: #{_lambda_.6} parent=35 // pred_check_branch
          %443 = sbr.rel (%p441) target = $region44
        $region43: #{_lambda_.6} parent=35 // pred_region
          %444 = vst.msk [vmem:[%s5] sm:$0x3] %vm412, %v410
          %445 = vst.msk [vmem:[%s6] sm:$0x3] %vm412, %v416
        $region44: #{_lambda_.6} parent=35 // pred_fallthru
          _
        %s446 = sand.u32 %s118, 1
        %s447 = scalar_lea.sflag [#allocation5], %s446
        %s448 = sand.u32 %s118, 1
        %s449 = scalar_lea.vmem [#allocation4], %s448
        // Predicated region
        $region45: #{_lambda_.6} parent=35 // pred_check
          %p450 = pneg %p128
        $region46: #{_lambda_.6} parent=35 // pred_check_branch
          %452 = sbr.rel (%p450) target = $region48
        $region47: #{_lambda_.6} parent=35 // pred_region
          %s454 = ssub.s32 16, 16
          %455 = vsyncadd %s447, %s454
          %s456 = smul.addr %s21, 16
          %s457 = scalar_lea.hbm %s4, %s456
          %s459 = sshll.u32 %s449, 4
          %s460 = int_to_ptr.vmem [resolvable:$true] %s459
          %462 = dma.vmem_to_hbm [thread:$0]  %s460, 16, %s457, %s447
        $region48: #{_lambda_.6} parent=35 // pred_fallthru
          _
        // Predicated region
        $region49: #{_lambda_.6} parent=35 // pred_check
          %p463 = pneg %p149
        $region50: #{_lambda_.6} parent=35 // pred_check_branch
          %465 = sbr.rel (%p463) target = $region52
        $region51: #{_lambda_.6} parent=35 // pred_region
          _
        $region52: #{_lambda_.6} parent=35 // pred_fallthru
          _
        // Predicated region
        $region53: #{_lambda_.6} parent=35 // pred_check
          %p466 = pneg %p170
        $region54: #{_lambda_.6} parent=35 // pred_check_branch
          %468 = sbr.rel (%p466) target = $region56
        $region55: #{_lambda_.6} parent=35 // pred_region
          _
        $region56: #{_lambda_.6} parent=35 // pred_fallthru
          _
        // Predicated region
        $region57: #{_lambda_.6} parent=35 // pred_check
          %p469 = pneg %p149
        $region58: #{_lambda_.6} parent=35 // pred_check_branch
          %471 = sbr.rel (%p469) target = $region60
        $region59: #{_lambda_.6} parent=35 // pred_region
          _
        $region60: #{_lambda_.6} parent=35 // pred_fallthru
          _
        // Predicated region
        $region61: #{_lambda_.6} parent=35 // pred_check
          %p472 = pneg %p170
        $region62: #{_lambda_.6} parent=35 // pred_check_branch
          %474 = sbr.rel (%p472) target = $region64
        $region63: #{_lambda_.6} parent=35 // pred_region
          _
        $region64: #{_lambda_.6} parent=35 // pred_fallthru
          _
      $region36: #{_lambda_.6} parent=5 // pred_fallthru
        _
      %p475 = scmp.le.s32.totalorder 2, %s16
      // Predicated region
      $region65: #{_lambda_.6} parent=5 // pred_check
        %p476 = pneg %p475
      $region66: #{_lambda_.6} parent=5 // pred_check_branch
        %478 = sbr.rel (%p476) target = $region68
      $region67: #{_lambda_.6} parent=5 // pred_region
        %s479 = ssub.s32 %s16, 2
        // Predicated region
        $region69: #{_lambda_.6} parent=67 // pred_check
          %p480 = pneg %p134
        $region70: #{_lambda_.6} parent=67 // pred_check_branch
          %482 = sbr.rel (%p480) target = $region72
        $region71: #{_lambda_.6} parent=67 // pred_region
          %s483 = sand.u32 %s119, 1
          %s484 = scalar_lea.sflag [#allocation5], %s483
          %s485 = sand.u32 %s119, 1
          %s486 = scalar_lea.vmem [#allocation4], %s485
          %487 = dma.done %s484, 16
        $region72: #{_lambda_.6} parent=67 // pred_fallthru
          _
      $region68: #{_lambda_.6} parent=5 // pred_fallthru
        _
    $region6: #{_lambda_.6} parent=1 // loop_footer
      %s20 = sadd.s32 1, %s16
    $region7: #{_lambda_.6} parent=1 // loop_footer_branch
      %15 = sbr.rel target = $region3
    $region8: #{_lambda_.6} parent=1 // loop_exit
      _
    %488 = vsyncpa [#allocation5], 1
    %s489 = scalar_lea.sflag [#allocation5], 1
    %490 = vsyncpa %s489, 1

// kernel: _lambda_.5
$region0: #{_lambda_.5}
  #allocation0 [shape = 'u32[]', space=smem, size = 0x4, offset = 0x4, fixed_abs, tag = 'smem constant byte address 0x4 - core index']
  #allocation1 [shape = 'u32[144,128]{1,0:T(1,128)}', space=vmem, size = 0x12000, scoped, tag = 'internal scratch']
  %s0 = inlined_call_operand.vmem [shape: bf16[16,32], index: 0, kind: input, shape index: {}]
  %s1 = inlined_call_operand.vmem [shape: bf16[128,32], index: 1, kind: input, shape index: {}]
  %s2 = inlined_call_operand.vmem [shape: f32[1,128], index: 2, kind: input, shape index: {}]
  %s3 = inlined_call_operand.vmem [shape: f32[16,128], index: 3, kind: output, shape index: {}]
  %s4 = sld [smem:[#allocation0]]
  $region22: #{_lambda_.5} parent=0
    _
  %s6 = ssub.s32 1, %s4
  %s7 = scalar_select 0, %s6, %s4
  // Predicated region
  $region2: #{_lambda_.5} parent=0 // pred_check
    _
  $region3: #{_lambda_.5} parent=0 // pred_check_branch
    %9 = sbr.rel (0) target = $region5
  $region4: #{_lambda_.5} parent=0 // pred_region
    _
  $region5: #{_lambda_.5} parent=0 // pred_fallthru
    _
  // Predicated region
  $region6: #{_lambda_.5} parent=0 // pred_check
    _
  $region7: #{_lambda_.5} parent=0 // pred_check_branch
    %11 = sbr.rel (0) target = $region9
  $region8: #{_lambda_.5} parent=0 // pred_region
    _
  $region9: #{_lambda_.5} parent=0 // pred_fallthru
    _
  // Predicated region
  $region10: #{_lambda_.5} parent=0 // pred_check
    _
  $region11: #{_lambda_.5} parent=0 // pred_check_branch
    %13 = sbr.rel (0) target = $region13
  $region12: #{_lambda_.5} parent=0 // pred_region
    _
  $region13: #{_lambda_.5} parent=0 // pred_fallthru
    _
  %v15 = vld [vmem:[%s0] sm:$0xf]
  %v16 = vld [vmem:[%s0 + $0x4] sm:$0xf]
  %v17 = vld [vmem:[%s1] sm:$0xf]
  %v18 = vld [vmem:[%s1 + $0x4] sm:$0xf]
  %v19 = vld [vmem:[%s1 + $0x8] sm:$0xf]
  %v20 = vld [vmem:[%s1 + $0xc] sm:$0xf]
  %v21 = vld [vmem:[%s1 + $0x10] sm:$0xf]
  %v22 = vld [vmem:[%s1 + $0x14] sm:$0xf]
  %v23 = vld [vmem:[%s1 + $0x18] sm:$0xf]
  %v24 = vld [vmem:[%s1 + $0x1c] sm:$0xf]
  %v25 = vld [vmem:[%s1 + $0x20] sm:$0xf]
  %v26 = vld [vmem:[%s1 + $0x24] sm:$0xf]
  %v27 = vld [vmem:[%s1 + $0x28] sm:$0xf]
  %v28 = vld [vmem:[%s1 + $0x2c] sm:$0xf]
  %v29 = vld [vmem:[%s1 + $0x30] sm:$0xf]
  %v30 = vld [vmem:[%s1 + $0x34] sm:$0xf]
  %v31 = vld [vmem:[%s1 + $0x38] sm:$0xf]
  %v32 = vld [vmem:[%s1 + $0x3c] sm:$0xf]
  %v33 = vld [vmem:[%s2] sm:$0x1]
  %v35 = vlaneseq
  %v36 = vshrl.u32 %v35, 7
  %v37 = vsub.s32 0, %v36
  %v38 = vrot.slane %v33, %v37
  %v42 = vunpack.c.l.b16 %v15
  %v43 = vunpack.c.l.b16 %v16
  %v44 = vpack.c.b16 %v43, %v42
  %v61 = vunpack.c.l.b16 %v17
  %v62 = vunpack.c.l.b16 %v18
  %v63 = vunpack.c.l.b16 %v19
  %v64 = vunpack.c.l.b16 %v20
  %v65 = vunpack.c.l.b16 %v21
  %v66 = vunpack.c.l.b16 %v22
  %v67 = vunpack.c.l.b16 %v23
  %v68 = vunpack.c.l.b16 %v24
  %v69 = vunpack.c.l.b16 %v25
  %v70 = vunpack.c.l.b16 %v26
  %v71 = vunpack.c.l.b16 %v27
  %v72 = vunpack.c.l.b16 %v28
  %v73 = vunpack.c.l.b16 %v29
  %v74 = vunpack.c.l.b16 %v30
  %v75 = vunpack.c.l.b16 %v31
  %v76 = vunpack.c.l.b16 %v32
  %v77 = vpack.c.b16 %v62, %v61
  %v78 = vpack.c.b16 %v64, %v63
  %v79 = vpack.c.b16 %v66, %v65
  %v80 = vpack.c.b16 %v68, %v67
  %v81 = vpack.c.b16 %v70, %v69
  %v82 = vpack.c.b16 %v72, %v71
  %v83 = vpack.c.b16 %v74, %v73
  %v84 = vpack.c.b16 %v76, %v75
  %vm85 = vcmask 261120
  %v87 = vsel %vm85, %v44, 0
  %v90 = vsel %vm85, %v77, 0
  %v93 = vsel %vm85, %v78, 0
  %v96 = vsel %vm85, %v79, 0
  %v99 = vsel %vm85, %v80, 0
  %v102 = vsel %vm85, %v81, 0
  %v105 = vsel %vm85, %v82, 0
  %v108 = vsel %vm85, %v83, 0
  %v111 = vsel %vm85, %v84, 0
  %113 = vmatprep.subr.bf16.mxu0 0
  %114 = vmatpush1.bf16.xpose.msra.mxu0 %v111
  %115 = vmatprep.subr.bf16.mxu0 0
  %116 = vmatpush1.bf16.xpose.msra.mxu0 %v108
  %117 = vmatprep.subr.bf16.mxu0 0
  %118 = vmatpush1.bf16.xpose.msra.mxu0 %v105
  %119 = vmatprep.subr.bf16.mxu0 0
  %120 = vmatpush1.bf16.xpose.msra.mxu0 %v102
  %121 = vmatprep.subr.bf16.mxu0 0
  %122 = vmatpush1.bf16.xpose.msra.mxu0 %v99
  %123 = vmatprep.subr.bf16.mxu0 0
  %124 = vmatpush1.bf16.xpose.msra.mxu0 %v96
  %125 = vmatprep.subr.bf16.mxu0 0
  %126 = vmatpush1.bf16.xpose.msra.mxu0 %v93
  %127 = vmatprep.subr.bf16.mxu0 0
  %128 = vmatpush1.bf16.xpose.msra.mxu0 %v90
  %129 = vmatprep.subr.bf16.mxu0 0
  %130 = vmatpush2.bf16.xpose.msra.mxu0 0
  %131 = vmatprep.subr.bf16.mxu0 0
  %132 = vmatpush2.bf16.xpose.msra.mxu0 0
  %133 = vmatprep.subr.bf16.mxu0 0
  %134 = vmatpush2.bf16.xpose.msra.mxu0 0
  %135 = vmatprep.subr.bf16.mxu0 0
  %136 = vmatpush2.bf16.xpose.msra.mxu0 0
  %137 = vmatprep.subr.bf16.mxu0 0
  %138 = vmatpush2.bf16.xpose.msra.mxu0 0
  %139 = vmatprep.subr.bf16.mxu0 0
  %140 = vmatpush2.bf16.xpose.msra.mxu0 0
  %141 = vmatprep.subr.bf16.mxu0 0
  %142 = vmatpush2.bf16.xpose.msra.mxu0 0
  %143 = vmatprep.subr.bf16.mxu0 0
  %144 = vmatpush2.bf16.xpose.msra.mxu0 0
  %145 = vmatprep.mubr.bf16.mxu0 0
  %146 = vmatmul.mubr.bf16.gmra.mxu0 %v87
  %v147 = vpop.f32.mrf.mxu0
  %v148 = vadd.f32 %v38, %v147
  %v149 = vpop.f32.mrf.mxu0
  %v150 = vpop.f32.mrf.mxu0
  %v151 = vadd.f32 %v38, %v150
  %v152 = vpop.f32.mrf.mxu0
  %153 = vdwg.mxu0
  %154 = vst [vmem:[%s3] sm:$0xff] %v148
  %155 = vst [vmem:[%s3 + $0x8] sm:$0xff] %v151
  // Predicated region
  $region14: #{_lambda_.5} parent=0 // pred_check
    _
  $region15: #{_lambda_.5} parent=0 // pred_check_branch
    %157 = sbr.rel (0) target = $region17
  $region16: #{_lambda_.5} parent=0 // pred_region
    _
  $region17: #{_lambda_.5} parent=0 // pred_fallthru
    _
  // Predicated region
  $region18: #{_lambda_.5} parent=0 // pred_check
    _
  $region19: #{_lambda_.5} parent=0 // pred_check_branch
    %159 = sbr.rel (0) target = $region21
  $region20: #{_lambda_.5} parent=0 // pred_region
    _
  $region21: #{_lambda_.5} parent=0 // pred_fallthru
    _

// kernel: _lambda_.9
$region0: #{_lambda_.9}
  #allocation0 [shape = 'u32[]', space=smem, size = 0x4, offset = 0x4, fixed_abs, tag = 'smem constant byte address 0x4 - core index']
  #allocation1 [shape = 'u32[144,128]{1,0:T(1,128)}', space=vmem, size = 0x12000, scoped, tag = 'internal scratch']
  %s0 = inlined_call_operand.vmem [shape: bf16[16,32], index: 0, kind: input, shape index: {}]
  %s1 = inlined_call_operand.vmem [shape: bf16[16,32], index: 1, kind: input, shape index: {}]
  %s2 = inlined_call_operand.vmem [shape: f32[1,16], index: 2, kind: input, shape index: {}]
  %s3 = inlined_call_operand.hbm [shape: f32[16,16], index: 3, kind: output, shape index: {}]
  %s4 = sld [smem:[#allocation0]]
  $region22: #{_lambda_.9} parent=0
    _
  %s6 = ssub.s32 1, %s4
  %s7 = scalar_select 0, %s6, %s4
  $region1: #{_lambda_.9} parent=0
    #allocation2 [shape = 'u8[8192]{0}', space=vmem, size = 0x2000, scoped, tag = 'output window, operand 0, single buffered']
    #allocation3 [shape = 's32[1]{0}', space=sflag, size = 0x4, scoped, tag = 'scoped memory for _lambda_.9']
    %8 = vsyncpa [#allocation3], 0
    // Predicated region
    $region2: #{_lambda_.9} parent=1 // pred_check
      _
    $region3: #{_lambda_.9} parent=1 // pred_check_branch
      %10 = sbr.rel (0) target = $region5
    $region4: #{_lambda_.9} parent=1 // pred_region
      _
    $region5: #{_lambda_.9} parent=1 // pred_fallthru
      _
    // Predicated region
    $region6: #{_lambda_.9} parent=1 // pred_check
      _
    $region7: #{_lambda_.9} parent=1 // pred_check_branch
      %12 = sbr.rel (0) target = $region9
    $region8: #{_lambda_.9} parent=1 // pred_region
      _
    $region9: #{_lambda_.9} parent=1 // pred_fallthru
      _
    // Predicated region
    $region10: #{_lambda_.9} parent=1 // pred_check
      _
    $region11: #{_lambda_.9} parent=1 // pred_check_branch
      %14 = sbr.rel (0) target = $region13
    $region12: #{_lambda_.9} parent=1 // pred_region
      _
    $region13: #{_lambda_.9} parent=1 // pred_fallthru
      _
    %v16 = vld [vmem:[%s0] sm:$0xf]
    %v17 = vld [vmem:[%s0 + $0x4] sm:$0xf]
    %v18 = vld [vmem:[%s1] sm:$0xf]
    %v19 = vld [vmem:[%s1 + $0x4] sm:$0xf]
    %v20 = vld [vmem:[%s2] sm:$0x1]
    %v22 = vlaneseq
    %v23 = vshrl.u32 %v22, 7
    %v24 = vsub.s32 0, %v23
    %v25 = vrot.slane %v20, %v24
    %v29 = vunpack.c.l.b16 %v16
    %v30 = vunpack.c.l.b16 %v17
    %v31 = vpack.c.b16 %v30, %v29
    %v34 = vunpack.c.l.b16 %v18
    %v35 = vunpack.c.l.b16 %v19
    %v36 = vpack.c.b16 %v35, %v34
    %vm37 = vcmask 261120
    %v39 = vsel %vm37, %v31, 0
    %v42 = vsel %vm37, %v36, 0
    %44 = vmatprep.subr.bf16.mxu0 0
    %45 = vmatpush1.bf16.xpose.msra.mxu0 0
    %46 = vmatprep.subr.bf16.mxu0 0
    %47 = vmatpush1.bf16.xpose.msra.mxu0 0
    %48 = vmatprep.subr.bf16.mxu0 0
    %49 = vmatpush1.bf16.xpose.msra.mxu0 0
    %50 = vmatprep.subr.bf16.mxu0 0
    %51 = vmatpush1.bf16.xpose.msra.mxu0 0
    %52 = vmatprep.subr.bf16.mxu0 0
    %53 = vmatpush1.bf16.xpose.msra.mxu0 0
    %54 = vmatprep.subr.bf16.mxu0 0
    %55 = vmatpush1.bf16.xpose.msra.mxu0 0
    %56 = vmatprep.subr.bf16.mxu0 0
    %57 = vmatpush1.bf16.xpose.msra.mxu0 0
    %58 = vmatprep.subr.bf16.mxu0 0
    %59 = vmatpush1.bf16.xpose.msra.mxu0 %v42
    %60 = vmatprep.subr.bf16.mxu0 0
    %61 = vmatpush2.bf16.xpose.msra.mxu0 0
    %62 = vmatprep.subr.bf16.mxu0 0
    %63 = vmatpush2.bf16.xpose.msra.mxu0 0
    %64 = vmatprep.subr.bf16.mxu0 0
    %65 = vmatpush2.bf16.xpose.msra.mxu0 0
    %66 = vmatprep.subr.bf16.mxu0 0
    %67 = vmatpush2.bf16.xpose.msra.mxu0 0
    %68 = vmatprep.subr.bf16.mxu0 0
    %69 = vmatpush2.bf16.xpose.msra.mxu0 0
    %70 = vmatprep.subr.bf16.mxu0 0
    %71 = vmatpush2.bf16.xpose.msra.mxu0 0
    %72 = vmatprep.subr.bf16.mxu0 0
    %73 = vmatpush2.bf16.xpose.msra.mxu0 0
    %74 = vmatprep.subr.bf16.mxu0 0
    %75 = vmatpush2.bf16.xpose.msra.mxu0 0
    %76 = vmatprep.mubr.bf16.mxu0 0
    %77 = vmatmul.mubr.bf16.gmra.mxu0 %v39
    %v78 = vpop.f32.mrf.mxu0
    %v79 = vadd.f32 %v25, %v78
    %v80 = vpop.f32.mrf.mxu0
    %v81 = vpop.f32.mrf.mxu0
    %v82 = vadd.f32 %v25, %v81
    %v83 = vpop.f32.mrf.mxu0
    %84 = vdwg.mxu0
    %vm85 = vcmask 130048
    %v86 = vsel %vm85, %v79, -inf
    %87 = vmax.xlane.f32.xlu0 %v86
    %v88 = vpop.xlane.xlu0 %87
    %v89 = vsel %vm85, %v82, -inf
    %90 = vmax.xlane.f32.xlu0 %v89
    %v91 = vpop.xlane.xlu0 %90
    %v92 = vsub.f32 %v79, %v88
    %v93 = vsub.f32 %v82, %v91
    %v94 = vmul.f32 %v92, 1.442695
    %v95 = vpow.pop %v94
    %v96 = vmul.f32 %v93, 1.442695
    %v97 = vpow.pop %v96
    %v98 = vsel %vm85, %v95, 0.0
    %99 = vadd.xlane.f32.xlu0 %v98
    %v100 = vpop.xlane.xlu0 %99
    %v101 = vsel %vm85, %v97, 0.0
    %102 = vadd.xlane.f32.xlu0 %v101
    %v103 = vpop.xlane.xlu0 %102
    %v104 = vlog2.pop %v100
    %v105 = vmul.f32 %v104, 0.6931472
    %v106 = vlog2.pop %v103
    %v107 = vmul.f32 %v106, 0.6931472
    %v108 = vsub.f32 %v92, %v105
    %v109 = vsub.f32 %v93, %v107
    %110 = vst.msk [vmem:[#allocation2] sm:$0xff] %vm85, %v108
    %111 = vst.msk [vmem:[#allocation2 + $0x8] sm:$0xff] %vm85, %v109
    // Predicated region
    $region14: #{_lambda_.9} parent=1 // pred_check
      _
    $region15: #{_lambda_.9} parent=1 // pred_check_branch
      %113 = sbr.rel (0) target = $region17
    $region16: #{_lambda_.9} parent=1 // pred_region
      %s115 = ssub.s32 256, 256
      %116 = vsyncadd [#allocation3], %s115
      %s117 = sshll.u32 [#allocation2], 4
      %s118 = int_to_ptr.vmem [resolvable:$true] %s117
      %123 = dma.vmem_to_hbm [thread:$0]  %s118, 256, %s3, [#allocation3], 128, 128, 8
    $region17: #{_lambda_.9} parent=1 // pred_fallthru
      _
    // Predicated region
    $region18: #{_lambda_.9} parent=1 // pred_check
      _
    $region19: #{_lambda_.9} parent=1 // pred_check_branch
      %125 = sbr.rel (0) target = $region21
    $region20: #{_lambda_.9} parent=1 // pred_region
      %126 = dma.done [#allocation3], 256
    $region21: #{_lambda_.9} parent=1 // pred_fallthru
      _
    %127 = vsyncpa [#allocation3], 1

// kernel: _lambda_.8
$region0: #{_lambda_.8}
  #allocation0 [shape = 'u32[]', space=smem, size = 0x4, offset = 0x4, fixed_abs, tag = 'smem constant byte address 0x4 - core index']
  #allocation1 [shape = 'u32[144,128]{1,0:T(1,128)}', space=vmem, size = 0x12000, scoped, tag = 'internal scratch']
  #allocation2 [shape = 'f32[2,32]{1,0:T(2,128)}', space=vmem, size = 0x400, scoped, tag = 'scratch operand']
  #allocation3 [shape = 'f32[2,32]{1,0:T(2,128)}', space=vmem, size = 0x400, scoped, tag = 'scratch operand']
  %s0 = inlined_call_operand.vmem [shape: f32[8,2,128], index: 0, kind: input, shape index: {}]
  %s1 = inlined_call_operand.vmem [shape: bf16[128,32], index: 1, kind: input, shape index: {}]
  %s2 = inlined_call_operand.vmem [shape: f32[2,32], index: 2, kind: input, shape index: {}]
  %s3 = inlined_call_operand.vmem [shape: f32[2,32], index: 3, kind: input, shape index: {}]
  %s4 = inlined_call_operand.vmem [shape: bf16[8,2,32], index: 4, kind: output, shape index: {0}]
  %s5 = inlined_call_operand.hbm [shape: f32[2,32], index: 5, kind: output, shape index: {1}]
  %s6 = inlined_call_operand.hbm [shape: f32[2,32], index: 6, kind: output, shape index: {2}]
  %7 = xla_tuple %s4, %s5, %s6
  %s8 = sld [smem:[#allocation0]]
  $region73: #{_lambda_.8} parent=0
    _
  %s10 = ssub.s32 1, %s8
  %s11 = scalar_select 0, %s10, %s8
  $region1: #{_lambda_.8} parent=0
    #allocation4 [shape = 'u8[1024]{0}', space=vmem, size = 0x400, scoped, tag = 'output window, operand 1, single buffered']
    #allocation5 [shape = 's32[2]{0}', space=sflag, size = 0x8, scoped, tag = 'scoped memory for _lambda_.8']
    #allocation6 [shape = 'u8[1024]{0}', space=vmem, size = 0x400, scoped, tag = 'output window, operand 2, single buffered']
    #allocation7 [shape = 's32[1]{0}', space=sflag, size = 0x4, scoped, tag = 'scoped memory for _lambda_.8']
    %12 = vsyncpa [#allocation5], 0
    %13 = vsyncpa [#allocation7], 0
    loop: start=0, step=1, limit=10
    $region2: #{_lambda_.8} parent=1 // loop_pre_header
      _
    $region3: #{_lambda_.8} parent=1 // loop_header
      %s15 = sphi 0, %s19
      %p16 = scmp.ge.s32.totalorder %s15, 10
      %s25 = sphi 0, %s27
      %s28 = sphi 0, %s25
      %s29 = sphi 0, %s28
      %s45 = sphi 0, %s29
      %s49 = sphi 0, %s49
      %s51 = sphi 0, %s49
      %s52 = sphi 0, %s51
      %s66 = sphi 0, %s52
      %s70 = sphi 0, %s70
      %s72 = sphi 0, %s70
      %s73 = sphi 0, %s72
      %s87 = sphi 0, %s73
      %s91 = sphi 0, %s91
      %s93 = sphi 0, %s91
      %s94 = sphi 0, %s93
      %s108 = sphi 0, %s94
      %s114 = sphi 0, %s116
      %s117 = sphi 0, %s114
      %s118 = sphi 0, %s117
      %s134 = sphi 0, %s118
      %s138 = sphi 0, %s138
      %s140 = sphi 0, %s138
      %s141 = sphi 0, %s140
      %s155 = sphi 0, %s141
      %s159 = sphi 0, %s159
      %s161 = sphi 0, %s159
      %s162 = sphi 0, %s161
      %s176 = sphi 0, %s162
    $region4: #{_lambda_.8} parent=1 // loop_header_branch
      %18 = sbr.rel (%p16) target = $region8
    $region5: #{_lambda_.8} parent=1 // loop_body
      %s20 = ssub.s32 %s15, 1
      %s21 = ssub.s32 %s15, 2
      %s22 = sadd.s32 %s15, 1
      %s23 = ssub.s32 %s15, %s22
      %p24 = scmp.eq.s32.totalorder %s23, 0
      %s26 = sadd.s32 %s25, 1
      %s27 = scalar_select %p24, %s25, %s26
      %p30 = pneg %p24
      %p31 = scmp.eq.s32.totalorder %s15, 7
      %p32 = por %p30, %p31
      %p33 = scmp.ne.s32.totalorder %s25, %s28
      %p34 = scmp.eq.s32.totalorder %s15, 0
      %p35 = por %p33, %p34
      %p36 = scmp.ne.s32.totalorder %s25, %s28
      %p37 = scmp.eq.s32.totalorder %s20, 7
      %p38 = por %p36, %p37
      %p39 = scmp.ne.s32.totalorder %s28, %s29
      %p40 = scmp.eq.s32.totalorder %s20, 0
      %p41 = por %p39, %p40
      %p42 = scmp.ne.s32.totalorder %s28, %s29
      %p43 = scmp.eq.s32.totalorder %s21, 7
      %p44 = por %p42, %p43
      %p46 = scmp.ne.s32.totalorder %s29, %s45
      %p47 = scmp.eq.s32.totalorder %s21, 0
      %p48 = por %p46, %p47
      %s50 = sadd.s32 %s49, 1
      %p53 = scmp.eq.s32.totalorder %s15, 7
      %p54 = scmp.ne.s32.totalorder %s49, %s51
      %p55 = scmp.eq.s32.totalorder %s15, 0
      %p56 = por %p54, %p55
      %p57 = scmp.ne.s32.totalorder %s49, %s51
      %p58 = scmp.eq.s32.totalorder %s20, 7
      %p59 = por %p57, %p58
      %p60 = scmp.ne.s32.totalorder %s51, %s52
      %p61 = scmp.eq.s32.totalorder %s20, 0
      %p62 = por %p60, %p61
      %p63 = scmp.ne.s32.totalorder %s51, %s52
      %p64 = scmp.eq.s32.totalorder %s21, 7
      %p65 = por %p63, %p64
      %p67 = scmp.ne.s32.totalorder %s52, %s66
      %p68 = scmp.eq.s32.totalorder %s21, 0
      %p69 = por %p67, %p68
      %s71 = sadd.s32 %s70, 1
      %p74 = scmp.eq.s32.totalorder %s15, 7
      %p75 = scmp.ne.s32.totalorder %s70, %s72
      %p76 = scmp.eq.s32.totalorder %s15, 0
      %p77 = por %p75, %p76
      %p78 = scmp.ne.s32.totalorder %s70, %s72
      %p79 = scmp.eq.s32.totalorder %s20, 7
      %p80 = por %p78, %p79
      %p81 = scmp.ne.s32.totalorder %s72, %s73
      %p82 = scmp.eq.s32.totalorder %s20, 0
      %p83 = por %p81, %p82
      %p84 = scmp.ne.s32.totalorder %s72, %s73
      %p85 = scmp.eq.s32.totalorder %s21, 7
      %p86 = por %p84, %p85
      %p88 = scmp.ne.s32.totalorder %s73, %s87
      %p89 = scmp.eq.s32.totalorder %s21, 0
      %p90 = por %p88, %p89
      %s92 = sadd.s32 %s91, 1
      %p95 = scmp.eq.s32.totalorder %s15, 7
      %p96 = scmp.ne.s32.totalorder %s91, %s93
      %p97 = scmp.eq.s32.totalorder %s15, 0
      %p98 = por %p96, %p97
      %p99 = scmp.ne.s32.totalorder %s91, %s93
      %p100 = scmp.eq.s32.totalorder %s20, 7
      %p101 = por %p99, %p100
      %p102 = scmp.ne.s32.totalorder %s93, %s94
      %p103 = scmp.eq.s32.totalorder %s20, 0
      %p104 = por %p102, %p103
      %p105 = scmp.ne.s32.totalorder %s93, %s94
      %p106 = scmp.eq.s32.totalorder %s21, 7
      %p107 = por %p105, %p106
      %p109 = scmp.ne.s32.totalorder %s94, %s108
      %p110 = scmp.eq.s32.totalorder %s21, 0
      %p111 = por %p109, %p110
      %s112 = ssub.s32 %s15, %s22
      %p113 = scmp.eq.s32.totalorder %s112, 0
      %s115 = sadd.s32 %s114, 1
      %s116 = scalar_select %p113, %s114, %s115
      %p119 = pneg %p113
      %p120 = scmp.eq.s32.totalorder %s15, 7
      %p121 = por %p119, %p120
      %p122 = scmp.ne.s32.totalorder %s114, %s117
      %p123 = scmp.eq.s32.totalorder %s15, 0
      %p124 = por %p122, %p123
      %p125 = scmp.ne.s32.totalorder %s114, %s117
      %p126 = scmp.eq.s32.totalorder %s20, 7
      %p127 = por %p125, %p126
      %p128 = scmp.ne.s32.totalorder %s117, %s118
      %p129 = scmp.eq.s32.totalorder %s20, 0
      %p130 = por %p128, %p129
      %p131 = scmp.ne.s32.totalorder %s117, %s118
      %p132 = scmp.eq.s32.totalorder %s21, 7
      %p133 = por %p131, %p132
      %p135 = scmp.ne.s32.totalorder %s118, %s134
      %p136 = scmp.eq.s32.totalorder %s21, 0
      %p137 = por %p135, %p136
      %s139 = sadd.s32 %s138, 1
      %p142 = scmp.eq.s32.totalorder %s15, 7
      %p143 = scmp.ne.s32.totalorder %s138, %s140
      %p144 = scmp.eq.s32.totalorder %s15, 0
      %p145 = por %p143, %p144
      %p146 = scmp.ne.s32.totalorder %s138, %s140
      %p147 = scmp.eq.s32.totalorder %s20, 7
      %p148 = por %p146, %p147
      %p149 = scmp.ne.s32.totalorder %s140, %s141
      %p150 = scmp.eq.s32.totalorder %s20, 0
      %p151 = por %p149, %p150
      %p152 = scmp.ne.s32.totalorder %s140, %s141
      %p153 = scmp.eq.s32.totalorder %s21, 7
      %p154 = por %p152, %p153
      %p156 = scmp.ne.s32.totalorder %s141, %s155
      %p157 = scmp.eq.s32.totalorder %s21, 0
      %p158 = por %p156, %p157
      %s160 = sadd.s32 %s159, 1
      %p163 = scmp.eq.s32.totalorder %s15, 7
      %p164 = scmp.ne.s32.totalorder %s159, %s161
      %p165 = scmp.eq.s32.totalorder %s15, 0
      %p166 = por %p164, %p165
      %p167 = scmp.ne.s32.totalorder %s159, %s161
      %p168 = scmp.eq.s32.totalorder %s20, 7
      %p169 = por %p167, %p168
      %p170 = scmp.ne.s32.totalorder %s161, %s162
      %p171 = scmp.eq.s32.totalorder %s20, 0
      %p172 = por %p170, %p171
      %p173 = scmp.ne.s32.totalorder %s161, %s162
      %p174 = scmp.eq.s32.totalorder %s21, 7
      %p175 = por %p173, %p174
      %p177 = scmp.ne.s32.totalorder %s162, %s176
      %p178 = scmp.eq.s32.totalorder %s21, 0
      %p179 = por %p177, %p178
      %p180 = scmp.le.s32.totalorder 1, %s15
      %p181 = scmp.lt.s32.totalorder %s15, 9
      %p182 = pnand %p180, %p181
      %p183 = pneg %p182
      // Predicated region
      $region9: #{_lambda_.8} parent=5 // pred_check
        _
      $region10: #{_lambda_.8} parent=5 // pred_check_branch
        %185 = sbr.rel (%p182) target = $region12
      $region11: #{_lambda_.8} parent=5 // pred_region
        %s186 = ssub.s32 %s15, 1
        // Predicated region
        $region13: #{_lambda_.8} parent=11 // pred_check
          %p187 = pneg %p62
        $region14: #{_lambda_.8} parent=11 // pred_check_branch
          %189 = sbr.rel (%p187) target = $region16
        $region15: #{_lambda_.8} parent=11 // pred_region
          _
        $region16: #{_lambda_.8} parent=11 // pred_fallthru
          _
        // Predicated region
        $region17: #{_lambda_.8} parent=11 // pred_check
          %p190 = pneg %p83
        $region18: #{_lambda_.8} parent=11 // pred_check_branch
          %192 = sbr.rel (%p190) target = $region20
        $region19: #{_lambda_.8} parent=11 // pred_region
          _
        $region20: #{_lambda_.8} parent=11 // pred_fallthru
          _
        // Predicated region
        $region21: #{_lambda_.8} parent=11 // pred_check
          %p193 = pneg %p104
        $region22: #{_lambda_.8} parent=11 // pred_check_branch
          %195 = sbr.rel (%p193) target = $region24
        $region23: #{_lambda_.8} parent=11 // pred_region
          _
        $region24: #{_lambda_.8} parent=11 // pred_fallthru
          _
      $region12: #{_lambda_.8} parent=5 // pred_fallthru
        _
      %p196 = scmp.lt.s32.totalorder %s15, 8
      // Predicated region
      $region25: #{_lambda_.8} parent=5 // pred_check
        %p197 = pneg %p196
      $region26: #{_lambda_.8} parent=5 // pred_check_branch
        %199 = sbr.rel (%p197) target = $region28
      $region27: #{_lambda_.8} parent=5 // pred_region
        // Predicated region
        $region29: #{_lambda_.8} parent=27 // pred_check
          %p200 = pneg %p35
        $region30: #{_lambda_.8} parent=27 // pred_check_branch
          %202 = sbr.rel (%p200) target = $region32
        $region31: #{_lambda_.8} parent=27 // pred_region
          %p203 = scmp.lt.s32.totalorder %s15, 7
          %s204 = scalar_select %p203, %s15, 7
          %s205 = smul.addr %s204, 2
          %s206 = scalar_lea.vmem %s0, %s205
        $region32: #{_lambda_.8} parent=27 // pred_fallthru
          _
      $region28: #{_lambda_.8} parent=5 // pred_fallthru
        _
      %p207 = scmp.le.s32.totalorder 1, %s15
      %p208 = scmp.lt.s32.totalorder %s15, 9
      %p209 = pnand %p207, %p208
      %p210 = pneg %p209
      // Predicated region
      $region33: #{_lambda_.8} parent=5 // pred_check
        _
      $region34: #{_lambda_.8} parent=5 // pred_check_branch
        %212 = sbr.rel (%p209) target = $region36
      $region35: #{_lambda_.8} parent=5 // pred_region
        %s213 = ssub.s32 %s15, 1
        %p214 = scmp.lt.s32.totalorder %s20, 7
        %s215 = scalar_select %p214, %s20, 7
        %s216 = smul.addr %s215, 2
        %s217 = scalar_lea.vmem %s0, %s216
        %p218 = pneg %p41
        %p219 = pneg %p38
        %p220 = pneg %p62
        %p221 = pneg %p59
        %p222 = pneg %p83
        %p223 = pneg %p80
        %p224 = pneg %p104
        %p225 = pneg %p101
        %p226 = pneg %p130
        %p227 = pneg %p127
        %p228 = scmp.lt.s32.totalorder %s20, 7
        %s229 = scalar_select %p228, %s20, 7
        %s230 = scalar_lea.vmem %s4, %s229
        %p231 = pneg %p151
        %p232 = pneg %p148
        %p233 = pneg %p172
        %p234 = pneg %p169
        %p235 = scmp.lt.s32.totalorder %s20, 7
        %s236 = scalar_select %p235, %s20, 7
        %s237 = smul.addr %s236, 2
        %s238 = scalar_lea.vmem %s0, %s237
        %p239 = scmp.lt.s32.totalorder %s20, 7
        %s240 = scalar_select %p239, %s20, 7
        %s241 = scalar_lea.vmem %s4, %s240
        %p243 = scmp.eq.s32.totalorder %s20, 0
        // Predicated region
        $region37: #{_lambda_.8} parent=35 // pred_check
          %p244 = pneg %p243
        $region38: #{_lambda_.8} parent=35 // pred_check_branch
          %246 = sbr.rel (%p244) target = $region40
        $region39: #{_lambda_.8} parent=35 // pred_region
          %v247 = vld [vmem:[%s2] sm:$0x3]
          %vm248 = vcmask 254976
          %249 = vst.msk [vmem:[#allocation2] sm:$0x3] %vm248, %v247
          %v250 = vld [vmem:[%s3] sm:$0x3]
          %251 = vst.msk [vmem:[#allocation3] sm:$0x3] %vm248, %v250
        $region40: #{_lambda_.8} parent=35 // pred_fallthru
          _
        %v252 = vld [vmem:[#allocation2] sm:$0x3]
        %v253 = vld [vmem:[#allocation3] sm:$0x3]
        %v254 = vpack.c.bf16 %v252, %v252
        %v255 = vld [vmem:[%s1] sm:$0xf]
        %v256 = vld [vmem:[%s1 + $0x4] sm:$0xf]
        %v257 = vld [vmem:[%s1 + $0x8] sm:$0xf]
        %v258 = vld [vmem:[%s1 + $0xc] sm:$0xf]
        %v259 = vld [vmem:[%s1 + $0x10] sm:$0xf]
        %v260 = vld [vmem:[%s1 + $0x14] sm:$0xf]
        %v261 = vld [vmem:[%s1 + $0x18] sm:$0xf]
        %v262 = vld [vmem:[%s1 + $0x1c] sm:$0xf]
        %v263 = vld [vmem:[%s1 + $0x20] sm:$0xf]
        %v264 = vld [vmem:[%s1 + $0x24] sm:$0xf]
        %v265 = vld [vmem:[%s1 + $0x28] sm:$0xf]
        %v266 = vld [vmem:[%s1 + $0x2c] sm:$0xf]
        %v267 = vld [vmem:[%s1 + $0x30] sm:$0xf]
        %v268 = vld [vmem:[%s1 + $0x34] sm:$0xf]
        %v269 = vld [vmem:[%s1 + $0x38] sm:$0xf]
        %v270 = vld [vmem:[%s1 + $0x3c] sm:$0xf]
        %v287 = vunpack.c.l.b16 %v255
        %v288 = vunpack.c.l.b16 %v256
        %v289 = vunpack.c.l.b16 %v257
        %v290 = vunpack.c.l.b16 %v258
        %v291 = vunpack.c.l.b16 %v259
        %v292 = vunpack.c.l.b16 %v260
        %v293 = vunpack.c.l.b16 %v261
        %v294 = vunpack.c.l.b16 %v262
        %v295 = vunpack.c.l.b16 %v263
        %v296 = vunpack.c.l.b16 %v264
        %v297 = vunpack.c.l.b16 %v265
        %v298 = vunpack.c.l.b16 %v266
        %v299 = vunpack.c.l.b16 %v267
        %v300 = vunpack.c.l.b16 %v268
        %v301 = vunpack.c.l.b16 %v269
        %v302 = vunpack.c.l.b16 %v270
        %v303 = vpack.c.b16 %v288, %v287
        %v304 = vpack.c.b16 %v290, %v289
        %v305 = vpack.c.b16 %v292, %v291
        %v306 = vpack.c.b16 %v294, %v293
        %v307 = vpack.c.b16 %v296, %v295
        %v308 = vpack.c.b16 %v298, %v297
        %v309 = vpack.c.b16 %v300, %v299
        %v310 = vpack.c.b16 %v302, %v301
        %vm311 = vcmask 261120
        %v313 = vsel %vm311, %v254, 0
        %v316 = vsel %vm311, %v303, 0
        %v319 = vsel %vm311, %v304, 0
        %v322 = vsel %vm311, %v305, 0
        %v325 = vsel %vm311, %v306, 0
        %v328 = vsel %vm311, %v307, 0
        %v331 = vsel %vm311, %v308, 0
        %v334 = vsel %vm311, %v309, 0
        %v337 = vsel %vm311, %v310, 0
        %339 = vmatprep.subr.bf16.mxu0 0
        %340 = vmatpush1.bf16.xpose.msra.mxu0 %v337
        %341 = vmatprep.subr.bf16.mxu0 0
        %342 = vmatpush1.bf16.xpose.msra.mxu0 %v334
        %343 = vmatprep.subr.bf16.mxu0 0
        %344 = vmatpush1.bf16.xpose.msra.mxu0 %v331
        %345 = vmatprep.subr.bf16.mxu0 0
        %346 = vmatpush1.bf16.xpose.msra.mxu0 %v328
        %347 = vmatprep.subr.bf16.mxu0 0
        %348 = vmatpush1.bf16.xpose.msra.mxu0 %v325
        %349 = vmatprep.subr.bf16.mxu0 0
        %350 = vmatpush1.bf16.xpose.msra.mxu0 %v322
        %351 = vmatprep.subr.bf16.mxu0 0
        %352 = vmatpush1.bf16.xpose.msra.mxu0 %v319
        %353 = vmatprep.subr.bf16.mxu0 0
        %354 = vmatpush1.bf16.xpose.msra.mxu0 %v316
        %355 = vmatprep.subr.bf16.mxu0 0
        %356 = vmatpush2.bf16.xpose.msra.mxu0 0
        %357 = vmatprep.subr.bf16.mxu0 0
        %358 = vmatpush2.bf16.xpose.msra.mxu0 0
        %359 = vmatprep.subr.bf16.mxu0 0
        %360 = vmatpush2.bf16.xpose.msra.mxu0 0
        %361 = vmatprep.subr.bf16.mxu0 0
        %362 = vmatpush2.bf16.xpose.msra.mxu0 0
        %363 = vmatprep.subr.bf16.mxu0 0
        %364 = vmatpush2.bf16.xpose.msra.mxu0 0
        %365 = vmatprep.subr.bf16.mxu0 0
        %366 = vmatpush2.bf16.xpose.msra.mxu0 0
        %367 = vmatprep.subr.bf16.mxu0 0
        %368 = vmatpush2.bf16.xpose.msra.mxu0 0
        %369 = vmatprep.subr.bf16.mxu0 0
        %370 = vmatpush2.bf16.xpose.msra.mxu0 0
        %371 = vmatprep.mubr.bf16.mxu0 0
        %372 = vmatmul.mubr.bf16.gmra.mxu0 %v313
        %v373 = vpop.f32.mrf.mxu0
        %v374 = vadd.f32 0.0, %v373
        %v375 = vpop.f32.mrf.mxu0
        %v376 = vpop.f32.mrf.mxu0
        %v377 = vpop.f32.mrf.mxu0
        %378 = vdwg.mxu0
        %v379 = vld [vmem:[%s238] sm:$0x3]
        %v380 = vadd.f32 %v379, %v374
        %v381 = vxor.u32 %v380, 2147483648
        %v382 = vmul.f32 %v381, 1.442695
        %v383 = vpow.pop %v382
        %v384 = vadd.f32 %v383, 1.0
        %v385 = vrcp.pop %v384
        %v386 = vmul.f32 1.0, %v385
        %v387 = vtanh.pop %v380
        %389 = vrot.lane.b32.xlu0 %v253, 32
        %v390 = vpop.permute.xlu0 %389
        %v392 = vmul.f32 %v386, %v390
        %394 = vrot.lane.b32.xlu0 %v387, 64
        %v395 = vpop.permute.xlu0 %394
        %v397 = vmul.f32 %v386, %v395
        %399 = vrot.lane.b32.xlu0 %v397, 32
        %v400 = vpop.permute.xlu0 %399
        %v402 = vadd.f32 %v392, %v400
        %v403 = vtanh.pop %v402
        %405 = vrot.lane.b32.xlu0 %v403, 64
        %v406 = vpop.permute.xlu0 %405
        %v408 = vmul.f32 %v386, %v406
        %410 = vrot.lane.b32.xlu0 %v408, 32
        %v411 = vpop.permute.xlu0 %410
        %vm413 = vcmask 254976
        %414 = vst.msk [vmem:[#allocation2] sm:$0x3] %vm413, %v411
        %416 = vrot.lane.b32.xlu0 %v402, 96
        %v417 = vpop.permute.xlu0 %416
        %419 = vst.msk [vmem:[#allocation3] sm:$0x3] %vm413, %v417
        %v420 = vpack.c.bf16 %v408, %v408
        %v423 = vunpack.c.l.s4 1966171168
        %v424 = vunpack.c.0.s8 %v423
        %v425 = vlaneseq
        %v426 = vshrl.u32 %v425, 7
        %v427 = vsub.s32 %v424, %v426
        %v428 = vrot.slane %v420, %v427
        %v430 = vunpack.c.l.s4 1966171168
        %v431 = vunpack.c.0.s8 %v430
        %v432 = vlaneseq
        %v433 = vshrl.u32 %v432, 7
        %v434 = vsub.s32 %v431, %v433
        %v435 = vrot.slane %v428, %v434
        %436 = vrot.lane.b32.xlu0 %v435, 32
        %v437 = vpop.permute.xlu0 %436
        %vm439 = vcmask 253952
        %440 = vst.msk [vmem:[%s241] sm:$0x1] %vm439, %v437
        %p441 = scmp.eq.s32.totalorder %s20, 7
        // Predicated region
        $region41: #{_lambda_.8} parent=35 // pred_check
          %p442 = pneg %p441
        $region42: #{_lambda_.8} parent=35 // pred_check_branch
          %444 = sbr.rel (%p442) target = $region44
        $region43: #{_lambda_.8} parent=35 // pred_region
          %445 = vst.msk [vmem:[#allocation4] sm:$0x3] %vm413, %v411
          %446 = vst.msk [vmem:[#allocation6] sm:$0x3] %vm413, %v417
        $region44: #{_lambda_.8} parent=35 // pred_fallthru
          _
        %p447 = scmp.lt.s32.totalorder %s20, 7
        %s448 = scalar_select %p447, %s20, 7
        %s449 = scalar_lea.vmem %s4, %s448
        // Predicated region
        $region45: #{_lambda_.8} parent=35 // pred_check
          %p450 = pneg %p127
        $region46: #{_lambda_.8} parent=35 // pred_check_branch
          %452 = sbr.rel (%p450) target = $region48
        $region47: #{_lambda_.8} parent=35 // pred_region
          _
        $region48: #{_lambda_.8} parent=35 // pred_fallthru
          _
        // Predicated region
        $region49: #{_lambda_.8} parent=35 // pred_check
          %p453 = pneg %p148
        $region50: #{_lambda_.8} parent=35 // pred_check_branch
          %455 = sbr.rel (%p453) target = $region52
        $region51: #{_lambda_.8} parent=35 // pred_region
          %s457 = ssub.s32 32, 32
          %458 = vsyncadd [#allocation5], %s457
          %s460 = sshll.u32 [#allocation4], 4
          %s461 = int_to_ptr.vmem [resolvable:$true] %s460
          %463 = dma.vmem_to_hbm [thread:$0]  %s461, 32, %s5, [#allocation5]
        $region52: #{_lambda_.8} parent=35 // pred_fallthru
          _
        // Predicated region
        $region53: #{_lambda_.8} parent=35 // pred_check
          %p464 = pneg %p169
        $region54: #{_lambda_.8} parent=35 // pred_check_branch
          %466 = sbr.rel (%p464) target = $region56
        $region55: #{_lambda_.8} parent=35 // pred_region
          %s468 = ssub.s32 32, 32
          %469 = vsyncadd [#allocation7], %s468
          %s471 = sshll.u32 [#allocation6], 4
          %s472 = int_to_ptr.vmem [resolvable:$true] %s471
          %474 = dma.vmem_to_hbm [thread:$0]  %s472, 32, %s6, [#allocation7]
        $region56: #{_lambda_.8} parent=35 // pred_fallthru
          _
        // Predicated region
        $region57: #{_lambda_.8} parent=35 // pred_check
          %p475 = pneg %p148
        $region58: #{_lambda_.8} parent=35 // pred_check_branch
          %477 = sbr.rel (%p475) target = $region60
        $region59: #{_lambda_.8} parent=35 // pred_region
          %478 = dma.done [#allocation5], 32
        $region60: #{_lambda_.8} parent=35 // pred_fallthru
          _
        // Predicated region
        $region61: #{_lambda_.8} parent=35 // pred_check
          %p479 = pneg %p169
        $region62: #{_lambda_.8} parent=35 // pred_check_branch
          %481 = sbr.rel (%p479) target = $region64
        $region63: #{_lambda_.8} parent=35 // pred_region
          %482 = dma.done [#allocation7], 32
        $region64: #{_lambda_.8} parent=35 // pred_fallthru
          _
      $region36: #{_lambda_.8} parent=5 // pred_fallthru
        _
      %p483 = scmp.le.s32.totalorder 2, %s15
      // Predicated region
      $region65: #{_lambda_.8} parent=5 // pred_check
        %p484 = pneg %p483
      $region66: #{_lambda_.8} parent=5 // pred_check_branch
        %486 = sbr.rel (%p484) target = $region68
      $region67: #{_lambda_.8} parent=5 // pred_region
        %s487 = ssub.s32 %s15, 2
        // Predicated region
        $region69: #{_lambda_.8} parent=67 // pred_check
          %p488 = pneg %p133
        $region70: #{_lambda_.8} parent=67 // pred_check_branch
          %490 = sbr.rel (%p488) target = $region72
        $region71: #{_lambda_.8} parent=67 // pred_region
          %p491 = scmp.lt.s32.totalorder %s21, 7
          %s492 = scalar_select %p491, %s21, 7
          %s493 = scalar_lea.vmem %s4, %s492
        $region72: #{_lambda_.8} parent=67 // pred_fallthru
          _
      $region68: #{_lambda_.8} parent=5 // pred_fallthru
        _
    $region6: #{_lambda_.8} parent=1 // loop_footer
      %s19 = sadd.s32 1, %s15
    $region7: #{_lambda_.8} parent=1 // loop_footer_branch
      %14 = sbr.rel target = $region3
    $region8: #{_lambda_.8} parent=1 // loop_exit
      _
    %494 = vsyncpa [#allocation5], 1
    %s495 = scalar_lea.sflag [#allocation5], 1
    %496 = vsyncpa %s495, 1
    %497 = vsyncpa [#allocation7], 1

</llo_original>
